<compile_context>
chip_gen: v6e
topology: v6e:2x2x1
jax: 0.10.0
libtpu: 0.0.40
codegen_flags: <defaults>
</compile_context>

<pallas_src>
import functools

import jax
import jax.numpy as jnp
from jax import lax
from jax.experimental import pallas as pl
from jax.experimental.pallas import tpu as pltpu


W_BLK = 8  # words processed per grid step


def _round_up(x, m):
    return ((x + m - 1) // m) * m


def _snn_kernel(scal_ref,                       # SMEM (6,): leak1, thr1, 1/thr1, leak2, thr2, 1/thr2
                slen_ref,                       # SMEM (1,): real seq_len (int32)
                emb_ref,                        # VMEM (W_BLK, b_tile, emb)
                w1t_ref, b1_ref,                # (E, H), (1, H)
                w2t_ref, b2_ref,                # (H, H), (1, H)
                w3t_ref, b3_ref,                # (H, H), (1, H)
                mem3_ref,                       # OUT (b_tile, H): Integrate_Neuron membrane
                mem1_ref, mem2_ref,             # VMEM scratch (b_tile, H): LIF membranes
                *, timesteps):
    """One grid step: W_BLK words x `timesteps` LIF updates for one batch tile."""
    wb = pl.program_id(1)

    # reset_LIF() / Integrate_Neuron.reset_mem(): zero all state at sequence start.
    @pl.when(wb == 0)
    def _():
        mem1_ref[...] = jnp.zeros_like(mem1_ref)
        mem2_ref[...] = jnp.zeros_like(mem2_ref)
        mem3_ref[...] = jnp.zeros_like(mem3_ref)

    leak1, thr1, inv_thr1 = scal_ref[0], scal_ref[1], scal_ref[2]
    leak2, thr2, inv_thr2 = scal_ref[3], scal_ref[4], scal_ref[5]
    seq_len = slen_ref[0]

    # Hoist weight loads / bias broadcasts: reused W_BLK * timesteps times.
    bshape = mem1_ref.shape
    w1t = w1t_ref[...]
    w2t = w2t_ref[...]
    w3t = w3t_ref[...]
    b1 = jnp.broadcast_to(b1_ref[...], bshape)
    b2 = jnp.broadcast_to(b2_ref[...], bshape)
    b3 = jnp.broadcast_to(b3_ref[...], bshape)

    def word_body(i, carry):
        m1, m2, m3 = carry
        x = emb_ref[i]                                               # (b_tile, emb)
        # First Linear is timestep-invariant -> hoisted out of the t-loop.
        h1 = jnp.dot(x, w1t, preferred_element_type=jnp.float32) + b1

        def t_body(_, c):
            c1, c2, c3 = c
            # LIF 1   (spike: mem/thr - 1 > 0  <=>  mem * (1/thr) > 1)
            c1 = leak1 * c1 + h1
            s1 = (c1 * inv_thr1 > 1.0).astype(jnp.float32)
            c1 = c1 - thr1 * s1
            # Dropout(0.2): eval-mode identity.
            # Linear(hidden, hidden) -> LIF 2
            h2 = jnp.dot(s1, w2t, preferred_element_type=jnp.float32) + b2
            c2 = leak2 * c2 + h2
            s2 = (c2 * inv_thr2 > 1.0).astype(jnp.float32)
            c2 = c2 - thr2 * s2
            # Linear(hidden, hidden) -> Integrate_Neuron
            c3 = c3 + jnp.dot(s2, w3t, preferred_element_type=jnp.float32) + b3
            return c1, c2, c3

        n1, n2, n3 = lax.fori_loop(0, timesteps, t_body, (m1, m2, m3),
                                   unroll=True)
        # Mask out words past the (possibly padded) end of the sequence.
        valid = (wb * emb_ref.shape[0] + i) < seq_len
        return (jnp.where(valid, n1, m1),
                jnp.where(valid, n2, m2),
                jnp.where(valid, n3, m3))

    m1, m2, m3 = lax.fori_loop(
        0, emb_ref.shape[0], word_body,
        (mem1_ref[...], mem2_ref[...], mem3_ref[...]))
    mem1_ref[...] = m1
    mem2_ref[...] = m2
    mem3_ref[...] = m3


def snn_forward(text, text_lengths, params, *, timesteps=10):
    """Pallas TPU implementation of SNN.forward (n_directions=1, eval-mode dropout).

    text: int32 [seq_len, batch] token ids (seq-major, like the PyTorch forward).
    text_lengths: unused by SNN.forward (kept for signature parity).
    """
    del text_lengths
    seq_len, batch = text.shape
    emb_table = params["embedding"]                     # [vocab, emb_dim]
    emb_dim = emb_table.shape[1]
    hidden = params["w1"].shape[0]

    # ---- embedding lookup (+ eval-mode identity dropout) in plain JAX ----
    # TODO(synk): training-mode dropout masks (self.mask / self.dropout) are not implemented.
    # TODO(synk): embedding rows could be gathered in-kernel via scalar-prefetched
    #             token ids; negligible at these sequence lengths.
    embedded = jnp.take(emb_table, text, axis=0).astype(jnp.float32)  # [seq, batch, emb]

    # ---- pad batch to the f32 sublane tile and seq to a W_BLK multiple ----
    padded_batch = max(8, _round_up(batch, 8))
    if padded_batch > 128:
        padded_batch = _round_up(batch, 128)
        b_tile = 128
    else:
        b_tile = padded_batch
    seq_pad = _round_up(seq_len, W_BLK)
    embedded = jnp.pad(
        embedded, ((0, seq_pad - seq_len), (0, padded_batch - batch), (0, 0)))

    # ---- scalars (LIF.reset_mem clamps leak to [0, 1]) ----
    leak1 = jnp.clip(jnp.asarray(params["leak1"], jnp.float32), 0.0, 1.0)
    leak2 = jnp.clip(jnp.asarray(params["leak2"], jnp.float32), 0.0, 1.0)
    thr1 = jnp.asarray(params["thr1"], jnp.float32)
    thr2 = jnp.asarray(params["thr2"], jnp.float32)
    scal = jnp.stack([leak1, thr1, 1.0 / thr1, leak2, thr2, 1.0 / thr2])
    slen = jnp.array([seq_len], dtype=jnp.int32)

    # ---- pre-transpose weights for MXU-native [M,K] @ [K,N] matmuls ----
    w1t = jnp.asarray(params["w1"], jnp.float32).T           # (emb, hidden)
    w2t = jnp.asarray(params["w2"], jnp.float32).T           # (hidden, hidden)
    w3t = jnp.asarray(params["w3"], jnp.float32).T           # (hidden, hidden)
    b1 = jnp.asarray(params["b1"], jnp.float32).reshape(1, hidden)
    b2 = jnp.asarray(params["b2"], jnp.float32).reshape(1, hidden)
    b3 = jnp.asarray(params["b3"], jnp.float32).reshape(1, hidden)

    n_btiles = padded_batch // b_tile
    n_wblocks = seq_pad // W_BLK

    def _resident(shape):
        # Whole-array-resident block; constant index_map => DMA'd once.
        return pl.BlockSpec(shape, lambda b, w, _n=len(shape): (0,) * _n)

    kernel = functools.partial(_snn_kernel, timesteps=timesteps)
    mem3 = pl.pallas_call(
        kernel,
        out_shape=jax.ShapeDtypeStruct((padded_batch, hidden), jnp.float32),
        grid=(n_btiles, n_wblocks),
        in_specs=[
            pl.BlockSpec(memory_space=pltpu.MemorySpace.SMEM),            # LIF scalars
            pl.BlockSpec(memory_space=pltpu.MemorySpace.SMEM),            # seq_len
            pl.BlockSpec((W_BLK, b_tile, emb_dim), lambda b, w: (w, b, 0)),  # word block
            _resident((emb_dim, hidden)), _resident((1, hidden)),         # W1^T, b1
            _resident((hidden, hidden)), _resident((1, hidden)),          # W2^T, b2
            _resident((hidden, hidden)), _resident((1, hidden)),          # W3^T, b3
        ],
        out_specs=pl.BlockSpec((b_tile, hidden), lambda b, w: (b, 0)),
        scratch_shapes=[pltpu.VMEM((b_tile, hidden), jnp.float32)] * 2,
        compiler_params=pltpu.CompilerParams(
            # Batch tiles are independent (v7x: split across the 2 TCs);
            # word blocks carry membrane state -> sequential.
            dimension_semantics=("parallel", "arbitrary")),
    )(scal, slen, embedded, w1t, b1, w2t, b2, w3t, b3)

    # ---- ANN read-out head (runs once on (batch, hidden)): plain JAX ----
    mem3 = mem3[:batch]
    z = mem3 / jnp.float32(batch)                        # out / embedded.shape[1]
    wa1 = jnp.asarray(params["wa1"], jnp.float32)
    wa2 = jnp.asarray(params["wa2"], jnp.float32)
    ba1 = jnp.asarray(params["ba1"], jnp.float32).reshape(1, -1)
    ba2 = jnp.asarray(params["ba2"], jnp.float32).reshape(1, -1)
    z = jnp.maximum(z @ wa1.T + ba1, 0.0)                # Linear -> ReLU (Dropout: identity)
    return z @ wa2.T + ba2                               # Linear(hidden, output_dim)


if __name__ == "__main__":
    key = jax.random.PRNGKey(0)
    # SNN defaults: input_dim(vocab)=100, embedding_dim=100, hidden_dim=128,
    # output_dim=1, timesteps=10; small example sequence/batch.
    vocab, emb_dim, hidden, out_dim = 100, 100, 128, 1
    seq_len, batch, timesteps = 8, 2, 10

    ks = jax.random.split(key, 8)
    emb_table = jax.random.normal(ks[0], (vocab, emb_dim), dtype=jnp.float32)
    emb_table = emb_table.at[0].set(0.0)                 # padding_idx = 0

    def lin_w(k, o, i, std=0.1):
        return jax.random.normal(k, (o, i), dtype=jnp.float32) * std

    params = {
        "embedding": emb_table,
        "w1": lin_w(ks[1], hidden, emb_dim), "b1": jnp.zeros((1, hidden), jnp.float32),
        "w2": lin_w(ks[2], hidden, hidden), "b2": jnp.zeros((1, hidden), jnp.float32),
        "w3": lin_w(ks[3], hidden, hidden), "b3": jnp.zeros((1, hidden), jnp.float32),
        "wa1": lin_w(ks[4], hidden, hidden), "ba1": jnp.zeros((1, hidden), jnp.float32),
        "wa2": lin_w(ks[5], out_dim, hidden), "ba2": jnp.zeros((1, out_dim), jnp.float32),
        "leak1": jnp.float32(0.95), "thr1": jnp.float32(1.0),
        "leak2": jnp.float32(0.95), "thr2": jnp.float32(1.0),
    }

    text = jax.random.randint(ks[6], (seq_len, batch), 0, vocab, dtype=jnp.int32)
    text_lengths = jnp.full((batch,), seq_len, dtype=jnp.int32)

    out = snn_forward(text, text_lengths, params, timesteps=timesteps)
    out = jax.block_until_ready(out)

    assert out.shape == (batch, out_dim)
    assert bool(jnp.all(jnp.isfinite(out)))
    print("KERNEL_OK")
</pallas_src>

<mosaic_0001>
module attributes {stable_mosaic.version = 11 : i64} {
  func.func @_snn_kernel(%arg0: i32, %arg1: i32, %arg2: memref<6xf32, #tpu.memory_space<smem>>, %arg3: memref<1xi32, #tpu.memory_space<smem>>, %arg4: memref<8x8x100xf32, #tpu.memory_space<vmem>>, %arg5: memref<100x128xf32, #tpu.memory_space<vmem>>, %arg6: memref<1x128xf32, #tpu.memory_space<vmem>>, %arg7: memref<128x128xf32, #tpu.memory_space<vmem>>, %arg8: memref<1x128xf32, #tpu.memory_space<vmem>>, %arg9: memref<128x128xf32, #tpu.memory_space<vmem>>, %arg10: memref<1x128xf32, #tpu.memory_space<vmem>>, %arg11: memref<8x128xf32, #tpu.memory_space<vmem>>, %arg12: memref<8x128xf32, #tpu.memory_space<vmem>>, %arg13: memref<8x128xf32, #tpu.memory_space<vmem>>) attributes {dimension_semantics = [#tpu.dimension_semantics<parallel>, #tpu.dimension_semantics<arbitrary>], iteration_bounds = array<i64: 1, 1>, scalar_prefetch = 0 : i64, scratch_operands = 2 : i64, tpu.core_type = #tpu.core_type<tc>, window_params = [{transform_indices = @transform_0, window_bounds = array<i64: 6>}, {transform_indices = @transform_1, window_bounds = array<i64: 1>}, {transform_indices = @transform_2, window_bounds = array<i64: 8, 8, 100>}, {pipeline_mode = #tpu.pipeline_mode<synchronous>, transform_indices = @transform_3, window_bounds = array<i64: 100, 128>}, {pipeline_mode = #tpu.pipeline_mode<synchronous>, transform_indices = @transform_4, window_bounds = array<i64: 1, 128>}, {pipeline_mode = #tpu.pipeline_mode<synchronous>, transform_indices = @transform_5, window_bounds = array<i64: 128, 128>}, {pipeline_mode = #tpu.pipeline_mode<synchronous>, transform_indices = @transform_6, window_bounds = array<i64: 1, 128>}, {pipeline_mode = #tpu.pipeline_mode<synchronous>, transform_indices = @transform_7, window_bounds = array<i64: 128, 128>}, {pipeline_mode = #tpu.pipeline_mode<synchronous>, transform_indices = @transform_8, window_bounds = array<i64: 1, 128>}, {transform_indices = @transform_9, window_bounds = array<i64: 8, 128>}]} {
    %c0_i32 = arith.constant 0 : i32
    %0 = arith.cmpi eq, %arg1, %c0_i32 : i32
    %1 = arith.extui %0 : i1 to i32
    %c0_i32_0 = arith.constant 0 : i32
    %2 = arith.cmpi ne, %1, %c0_i32_0 : i32
    scf.if %2 {
      %cst = arith.constant 0.000000e+00 : f32
      %30 = vector.broadcast %cst : f32 to vector<8x128xf32>
      %c0_28 = arith.constant 0 : index
      %c0_29 = arith.constant 0 : index
      %31 = vector.load %arg12[%c0_28, %c0_29] : memref<8x128xf32, #tpu.memory_space<vmem>>, vector<8x128xf32>
      tpu.vector_store %arg12[%c0_28, %c0_29], %30 {strides = array<i32>} : memref<8x128xf32, #tpu.memory_space<vmem>>, vector<8x128xf32>,
      %cst_30 = arith.constant 0.000000e+00 : f32
      %32 = vector.broadcast %cst_30 : f32 to vector<8x128xf32>
      %c0_31 = arith.constant 0 : index
      %c0_32 = arith.constant 0 : index
      %33 = vector.load %arg13[%c0_31, %c0_32] : memref<8x128xf32, #tpu.memory_space<vmem>>, vector<8x128xf32>
      tpu.vector_store %arg13[%c0_31, %c0_32], %32 {strides = array<i32>} : memref<8x128xf32, #tpu.memory_space<vmem>>, vector<8x128xf32>,
      %cst_33 = arith.constant 0.000000e+00 : f32
      %34 = vector.broadcast %cst_33 : f32 to vector<8x128xf32>
      %c0_34 = arith.constant 0 : index
      %c0_35 = arith.constant 0 : index
      %35 = vector.load %arg11[%c0_34, %c0_35] : memref<8x128xf32, #tpu.memory_space<vmem>>, vector<8x128xf32>
      tpu.vector_store %arg11[%c0_34, %c0_35], %34 {strides = array<i32>} : memref<8x128xf32, #tpu.memory_space<vmem>>, vector<8x128xf32>,
    } else {
    }
    %c0 = arith.constant 0 : index
    %3 = memref.load %arg2[%c0] : memref<6xf32, #tpu.memory_space<smem>>
    %c1 = arith.constant 1 : index
    %4 = memref.load %arg2[%c1] : memref<6xf32, #tpu.memory_space<smem>>
    %c2 = arith.constant 2 : index
    %5 = memref.load %arg2[%c2] : memref<6xf32, #tpu.memory_space<smem>>
    %c3 = arith.constant 3 : index
    %6 = memref.load %arg2[%c3] : memref<6xf32, #tpu.memory_space<smem>>
    %c4 = arith.constant 4 : index
    %7 = memref.load %arg2[%c4] : memref<6xf32, #tpu.memory_space<smem>>
    %c5 = arith.constant 5 : index
    %8 = memref.load %arg2[%c5] : memref<6xf32, #tpu.memory_space<smem>>
    %c0_1 = arith.constant 0 : index
    %9 = memref.load %arg3[%c0_1] : memref<1xi32, #tpu.memory_space<smem>>
    %c0_2 = arith.constant 0 : index
    %c0_3 = arith.constant 0 : index
    %10 = vector.load %arg5[%c0_2, %c0_3] : memref<100x128xf32, #tpu.memory_space<vmem>>, vector<100x128xf32>
    %c0_4 = arith.constant 0 : index
    %c0_5 = arith.constant 0 : index
    %11 = vector.load %arg7[%c0_4, %c0_5] : memref<128x128xf32, #tpu.memory_space<vmem>>, vector<128x128xf32>
    %c0_6 = arith.constant 0 : index
    %c0_7 = arith.constant 0 : index
    %12 = vector.load %arg9[%c0_6, %c0_7] : memref<128x128xf32, #tpu.memory_space<vmem>>, vector<128x128xf32>
    %c0_8 = arith.constant 0 : index
    %c0_9 = arith.constant 0 : index
    %13 = vector.load %arg6[%c0_8, %c0_9] : memref<1x128xf32, #tpu.memory_space<vmem>>, vector<1x128xf32>
    %14 = vector.shape_cast %13 : vector<1x128xf32> to vector<1x128xf32>
    %15 = vector.broadcast %14 : vector<1x128xf32> to vector<8x128xf32>
    %c0_10 = arith.constant 0 : index
    %c0_11 = arith.constant 0 : index
    %16 = vector.load %arg8[%c0_10, %c0_11] : memref<1x128xf32, #tpu.memory_space<vmem>>, vector<1x128xf32>
    %17 = vector.shape_cast %16 : vector<1x128xf32> to vector<1x128xf32>
    %18 = vector.broadcast %17 : vector<1x128xf32> to vector<8x128xf32>
    %c0_12 = arith.constant 0 : index
    %c0_13 = arith.constant 0 : index
    %19 = vector.load %arg10[%c0_12, %c0_13] : memref<1x128xf32, #tpu.memory_space<vmem>>, vector<1x128xf32>
    %20 = vector.shape_cast %19 : vector<1x128xf32> to vector<1x128xf32>
    %21 = vector.broadcast %20 : vector<1x128xf32> to vector<8x128xf32>
    %c0_14 = arith.constant 0 : index
    %c0_15 = arith.constant 0 : index
    %22 = vector.load %arg12[%c0_14, %c0_15] : memref<8x128xf32, #tpu.memory_space<vmem>>, vector<8x128xf32>
    %c0_16 = arith.constant 0 : index
    %c0_17 = arith.constant 0 : index
    %23 = vector.load %arg13[%c0_16, %c0_17] : memref<8x128xf32, #tpu.memory_space<vmem>>, vector<8x128xf32>
    %c0_18 = arith.constant 0 : index
    %c0_19 = arith.constant 0 : index
    %24 = vector.load %arg11[%c0_18, %c0_19] : memref<8x128xf32, #tpu.memory_space<vmem>>, vector<8x128xf32>
    %c0_i32_20 = arith.constant 0 : i32
    %c8_i32 = arith.constant 8 : i32
    %25 = arith.addi %c0_i32_20, %c8_i32 : i32
    %c1_i32 = arith.constant 1 : i32
    %26:3 = scf.for %arg14 = %c0_i32_20 to %25 step %c1_i32 iter_args(%arg15 = %22, %arg16 = %23, %arg17 = %24) -> (vector<8x128xf32>, vector<8x128xf32>, vector<8x128xf32>)  : i32 {
      %30 = arith.index_cast %arg14 : i32 to index
      %c0_28 = arith.constant 0 : index
      %c0_29 = arith.constant 0 : index
      %31 = vector.load %arg4[%30, %c0_28, %c0_29] : memref<8x8x100xf32, #tpu.memory_space<vmem>>, vector<1x8x100xf32>
      %32 = vector.shape_cast %31 : vector<1x8x100xf32> to vector<8x100xf32>
      %cst = arith.constant dense<0.000000e+00> : vector<8x128xf32>
      %33 = tpu.matmul %32, %10, %cst {dimension_numbers = #tpu.dot_dimension_numbers<[1], [0], [0], [1], [0, 0, 1, 1], [], []>} : vector<8x100xf32>, vector<100x128xf32>, vector<8x128xf32> -> vector<8x128xf32>
      %34 = arith.addf %33, %15 : vector<8x128xf32>
      %c0_i32_30 = arith.constant 0 : i32
      %35 = vector.broadcast %3 : f32 to vector<8x128xf32>
      %36 = arith.mulf %35, %arg15 : vector<8x128xf32>
      %37 = arith.addf %36, %34 : vector<8x128xf32>
      %38 = vector.broadcast %5 : f32 to vector<8x128xf32>
      %39 = arith.mulf %37, %38 : vector<8x128xf32>
      %cst_31 = arith.constant 1.000000e+00 : f32
      %40 = vector.broadcast %cst_31 : f32 to vector<8x128xf32>
      %41 = arith.cmpf ogt, %39, %40 : vector<8x128xf32>
      %42 = arith.extui %41 : vector<8x128xi1> to vector<8x128xi32>
      %43 = arith.sitofp %42 : vector<8x128xi32> to vector<8x128xf32>
      %44 = vector.broadcast %4 : f32 to vector<8x128xf32>
      %45 = arith.mulf %44, %43 : vector<8x128xf32>
      %46 = arith.subf %37, %45 : vector<8x128xf32>
      %cst_32 = arith.constant dense<0.000000e+00> : vector<8x128xf32>
      %47 = tpu.matmul %43, %11, %cst_32 {dimension_numbers = #tpu.dot_dimension_numbers<[1], [0], [0], [1], [0, 0, 1, 1], [], []>} : vector<8x128xf32>, vector<128x128xf32>, vector<8x128xf32> -> vector<8x128xf32>
      %48 = arith.addf %47, %18 : vector<8x128xf32>
      %49 = vector.broadcast %6 : f32 to vector<8x128xf32>
      %50 = arith.mulf %49, %arg16 : vector<8x128xf32>
      %51 = arith.addf %50, %48 : vector<8x128xf32>
      %52 = vector.broadcast %8 : f32 to vector<8x128xf32>
      %53 = arith.mulf %51, %52 : vector<8x128xf32>
      %cst_33 = arith.constant 1.000000e+00 : f32
      %54 = vector.broadcast %cst_33 : f32 to vector<8x128xf32>
      %55 = arith.cmpf ogt, %53, %54 : vector<8x128xf32>
      %56 = arith.extui %55 : vector<8x128xi1> to vector<8x128xi32>
      %57 = arith.sitofp %56 : vector<8x128xi32> to vector<8x128xf32>
      %58 = vector.broadcast %7 : f32 to vector<8x128xf32>
      %59 = arith.mulf %58, %57 : vector<8x128xf32>
      %60 = arith.subf %51, %59 : vector<8x128xf32>
      %cst_34 = arith.constant dense<0.000000e+00> : vector<8x128xf32>
      %61 = tpu.matmul %57, %12, %cst_34 {dimension_numbers = #tpu.dot_dimension_numbers<[1], [0], [0], [1], [0, 0, 1, 1], [], []>} : vector<8x128xf32>, vector<128x128xf32>, vector<8x128xf32> -> vector<8x128xf32>
      %62 = arith.addf %arg17, %61 : vector<8x128xf32>
      %63 = arith.addf %62, %21 : vector<8x128xf32>
      %c1_i32_35 = arith.constant 1 : i32
      %64 = vector.broadcast %3 : f32 to vector<8x128xf32>
      %65 = arith.mulf %64, %46 : vector<8x128xf32>
      %66 = arith.addf %65, %34 : vector<8x128xf32>
      %67 = vector.broadcast %5 : f32 to vector<8x128xf32>
      %68 = arith.mulf %66, %67 : vector<8x128xf32>
      %cst_36 = arith.constant 1.000000e+00 : f32
      %69 = vector.broadcast %cst_36 : f32 to vector<8x128xf32>
      %70 = arith.cmpf ogt, %68, %69 : vector<8x128xf32>
      %71 = arith.extui %70 : vector<8x128xi1> to vector<8x128xi32>
      %72 = arith.sitofp %71 : vector<8x128xi32> to vector<8x128xf32>
      %73 = vector.broadcast %4 : f32 to vector<8x128xf32>
      %74 = arith.mulf %73, %72 : vector<8x128xf32>
      %75 = arith.subf %66, %74 : vector<8x128xf32>
      %cst_37 = arith.constant dense<0.000000e+00> : vector<8x128xf32>
      %76 = tpu.matmul %72, %11, %cst_37 {dimension_numbers = #tpu.dot_dimension_numbers<[1], [0], [0], [1], [0, 0, 1, 1], [], []>} : vector<8x128xf32>, vector<128x128xf32>, vector<8x128xf32> -> vector<8x128xf32>
      %77 = arith.addf %76, %18 : vector<8x128xf32>
      %78 = vector.broadcast %6 : f32 to vector<8x128xf32>
      %79 = arith.mulf %78, %60 : vector<8x128xf32>
      %80 = arith.addf %79, %77 : vector<8x128xf32>
      %81 = vector.broadcast %8 : f32 to vector<8x128xf32>
      %82 = arith.mulf %80, %81 : vector<8x128xf32>
      %cst_38 = arith.constant 1.000000e+00 : f32
      %83 = vector.broadcast %cst_38 : f32 to vector<8x128xf32>
      %84 = arith.cmpf ogt, %82, %83 : vector<8x128xf32>
      %85 = arith.extui %84 : vector<8x128xi1> to vector<8x128xi32>
      %86 = arith.sitofp %85 : vector<8x128xi32> to vector<8x128xf32>
      %87 = vector.broadcast %7 : f32 to vector<8x128xf32>
      %88 = arith.mulf %87, %86 : vector<8x128xf32>
      %89 = arith.subf %80, %88 : vector<8x128xf32>
      %cst_39 = arith.constant dense<0.000000e+00> : vector<8x128xf32>
      %90 = tpu.matmul %86, %12, %cst_39 {dimension_numbers = #tpu.dot_dimension_numbers<[1], [0], [0], [1], [0, 0, 1, 1], [], []>} : vector<8x128xf32>, vector<128x128xf32>, vector<8x128xf32> -> vector<8x128xf32>
      %91 = arith.addf %63, %90 : vector<8x128xf32>
      %92 = arith.addf %91, %21 : vector<8x128xf32>
      %c2_i32 = arith.constant 2 : i32
      %93 = vector.broadcast %3 : f32 to vector<8x128xf32>
      %94 = arith.mulf %93, %75 : vector<8x128xf32>
      %95 = arith.addf %94, %34 : vector<8x128xf32>
      %96 = vector.broadcast %5 : f32 to vector<8x128xf32>
      %97 = arith.mulf %95, %96 : vector<8x128xf32>
      %cst_40 = arith.constant 1.000000e+00 : f32
      %98 = vector.broadcast %cst_40 : f32 to vector<8x128xf32>
      %99 = arith.cmpf ogt, %97, %98 : vector<8x128xf32>
      %100 = arith.extui %99 : vector<8x128xi1> to vector<8x128xi32>
      %101 = arith.sitofp %100 : vector<8x128xi32> to vector<8x128xf32>
      %102 = vector.broadcast %4 : f32 to vector<8x128xf32>
      %103 = arith.mulf %102, %101 : vector<8x128xf32>
      %104 = arith.subf %95, %103 : vector<8x128xf32>
      %cst_41 = arith.constant dense<0.000000e+00> : vector<8x128xf32>
      %105 = tpu.matmul %101, %11, %cst_41 {dimension_numbers = #tpu.dot_dimension_numbers<[1], [0], [0], [1], [0, 0, 1, 1], [], []>} : vector<8x128xf32>, vector<128x128xf32>, vector<8x128xf32> -> vector<8x128xf32>
      %106 = arith.addf %105, %18 : vector<8x128xf32>
      %107 = vector.broadcast %6 : f32 to vector<8x128xf32>
      %108 = arith.mulf %107, %89 : vector<8x128xf32>
      %109 = arith.addf %108, %106 : vector<8x128xf32>
      %110 = vector.broadcast %8 : f32 to vector<8x128xf32>
      %111 = arith.mulf %109, %110 : vector<8x128xf32>
      %cst_42 = arith.constant 1.000000e+00 : f32
      %112 = vector.broadcast %cst_42 : f32 to vector<8x128xf32>
      %113 = arith.cmpf ogt, %111, %112 : vector<8x128xf32>
      %114 = arith.extui %113 : vector<8x128xi1> to vector<8x128xi32>
      %115 = arith.sitofp %114 : vector<8x128xi32> to vector<8x128xf32>
      %116 = vector.broadcast %7 : f32 to vector<8x128xf32>
      %117 = arith.mulf %116, %115 : vector<8x128xf32>
      %118 = arith.subf %109, %117 : vector<8x128xf32>
      %cst_43 = arith.constant dense<0.000000e+00> : vector<8x128xf32>
      %119 = tpu.matmul %115, %12, %cst_43 {dimension_numbers = #tpu.dot_dimension_numbers<[1], [0], [0], [1], [0, 0, 1, 1], [], []>} : vector<8x128xf32>, vector<128x128xf32>, vector<8x128xf32> -> vector<8x128xf32>
      %120 = arith.addf %92, %119 : vector<8x128xf32>
      %121 = arith.addf %120, %21 : vector<8x128xf32>
      %c3_i32 = arith.constant 3 : i32
      %122 = vector.broadcast %3 : f32 to vector<8x128xf32>
      %123 = arith.mulf %122, %104 : vector<8x128xf32>
      %124 = arith.addf %123, %34 : vector<8x128xf32>
      %125 = vector.broadcast %5 : f32 to vector<8x128xf32>
      %126 = arith.mulf %124, %125 : vector<8x128xf32>
      %cst_44 = arith.constant 1.000000e+00 : f32
      %127 = vector.broadcast %cst_44 : f32 to vector<8x128xf32>
      %128 = arith.cmpf ogt, %126, %127 : vector<8x128xf32>
      %129 = arith.extui %128 : vector<8x128xi1> to vector<8x128xi32>
      %130 = arith.sitofp %129 : vector<8x128xi32> to vector<8x128xf32>
      %131 = vector.broadcast %4 : f32 to vector<8x128xf32>
      %132 = arith.mulf %131, %130 : vector<8x128xf32>
      %133 = arith.subf %124, %132 : vector<8x128xf32>
      %cst_45 = arith.constant dense<0.000000e+00> : vector<8x128xf32>
      %134 = tpu.matmul %130, %11, %cst_45 {dimension_numbers = #tpu.dot_dimension_numbers<[1], [0], [0], [1], [0, 0, 1, 1], [], []>} : vector<8x128xf32>, vector<128x128xf32>, vector<8x128xf32> -> vector<8x128xf32>
      %135 = arith.addf %134, %18 : vector<8x128xf32>
      %136 = vector.broadcast %6 : f32 to vector<8x128xf32>
      %137 = arith.mulf %136, %118 : vector<8x128xf32>
      %138 = arith.addf %137, %135 : vector<8x128xf32>
      %139 = vector.broadcast %8 : f32 to vector<8x128xf32>
      %140 = arith.mulf %138, %139 : vector<8x128xf32>
      %cst_46 = arith.constant 1.000000e+00 : f32
      %141 = vector.broadcast %cst_46 : f32 to vector<8x128xf32>
      %142 = arith.cmpf ogt, %140, %141 : vector<8x128xf32>
      %143 = arith.extui %142 : vector<8x128xi1> to vector<8x128xi32>
      %144 = arith.sitofp %143 : vector<8x128xi32> to vector<8x128xf32>
      %145 = vector.broadcast %7 : f32 to vector<8x128xf32>
      %146 = arith.mulf %145, %144 : vector<8x128xf32>
      %147 = arith.subf %138, %146 : vector<8x128xf32>
      %cst_47 = arith.constant dense<0.000000e+00> : vector<8x128xf32>
      %148 = tpu.matmul %144, %12, %cst_47 {dimension_numbers = #tpu.dot_dimension_numbers<[1], [0], [0], [1], [0, 0, 1, 1], [], []>} : vector<8x128xf32>, vector<128x128xf32>, vector<8x128xf32> -> vector<8x128xf32>
      %149 = arith.addf %121, %148 : vector<8x128xf32>
      %150 = arith.addf %149, %21 : vector<8x128xf32>
      %c4_i32 = arith.constant 4 : i32
      %151 = vector.broadcast %3 : f32 to vector<8x128xf32>
      %152 = arith.mulf %151, %133 : vector<8x128xf32>
      %153 = arith.addf %152, %34 : vector<8x128xf32>
      %154 = vector.broadcast %5 : f32 to vector<8x128xf32>
      %155 = arith.mulf %153, %154 : vector<8x128xf32>
      %cst_48 = arith.constant 1.000000e+00 : f32
      %156 = vector.broadcast %cst_48 : f32 to vector<8x128xf32>
      %157 = arith.cmpf ogt, %155, %156 : vector<8x128xf32>
      %158 = arith.extui %157 : vector<8x128xi1> to vector<8x128xi32>
      %159 = arith.sitofp %158 : vector<8x128xi32> to vector<8x128xf32>
      %160 = vector.broadcast %4 : f32 to vector<8x128xf32>
      %161 = arith.mulf %160, %159 : vector<8x128xf32>
      %162 = arith.subf %153, %161 : vector<8x128xf32>
      %cst_49 = arith.constant dense<0.000000e+00> : vector<8x128xf32>
      %163 = tpu.matmul %159, %11, %cst_49 {dimension_numbers = #tpu.dot_dimension_numbers<[1], [0], [0], [1], [0, 0, 1, 1], [], []>} : vector<8x128xf32>, vector<128x128xf32>, vector<8x128xf32> -> vector<8x128xf32>
      %164 = arith.addf %163, %18 : vector<8x128xf32>
      %165 = vector.broadcast %6 : f32 to vector<8x128xf32>
      %166 = arith.mulf %165, %147 : vector<8x128xf32>
      %167 = arith.addf %166, %164 : vector<8x128xf32>
      %168 = vector.broadcast %8 : f32 to vector<8x128xf32>
      %169 = arith.mulf %167, %168 : vector<8x128xf32>
      %cst_50 = arith.constant 1.000000e+00 : f32
      %170 = vector.broadcast %cst_50 : f32 to vector<8x128xf32>
      %171 = arith.cmpf ogt, %169, %170 : vector<8x128xf32>
      %172 = arith.extui %171 : vector<8x128xi1> to vector<8x128xi32>
      %173 = arith.sitofp %172 : vector<8x128xi32> to vector<8x128xf32>
      %174 = vector.broadcast %7 : f32 to vector<8x128xf32>
      %175 = arith.mulf %174, %173 : vector<8x128xf32>
      %176 = arith.subf %167, %175 : vector<8x128xf32>
      %cst_51 = arith.constant dense<0.000000e+00> : vector<8x128xf32>
      %177 = tpu.matmul %173, %12, %cst_51 {dimension_numbers = #tpu.dot_dimension_numbers<[1], [0], [0], [1], [0, 0, 1, 1], [], []>} : vector<8x128xf32>, vector<128x128xf32>, vector<8x128xf32> -> vector<8x128xf32>
      %178 = arith.addf %150, %177 : vector<8x128xf32>
      %179 = arith.addf %178, %21 : vector<8x128xf32>
      %c5_i32 = arith.constant 5 : i32
      %180 = vector.broadcast %3 : f32 to vector<8x128xf32>
      %181 = arith.mulf %180, %162 : vector<8x128xf32>
      %182 = arith.addf %181, %34 : vector<8x128xf32>
      %183 = vector.broadcast %5 : f32 to vector<8x128xf32>
      %184 = arith.mulf %182, %183 : vector<8x128xf32>
      %cst_52 = arith.constant 1.000000e+00 : f32
      %185 = vector.broadcast %cst_52 : f32 to vector<8x128xf32>
      %186 = arith.cmpf ogt, %184, %185 : vector<8x128xf32>
      %187 = arith.extui %186 : vector<8x128xi1> to vector<8x128xi32>
      %188 = arith.sitofp %187 : vector<8x128xi32> to vector<8x128xf32>
      %189 = vector.broadcast %4 : f32 to vector<8x128xf32>
      %190 = arith.mulf %189, %188 : vector<8x128xf32>
      %191 = arith.subf %182, %190 : vector<8x128xf32>
      %cst_53 = arith.constant dense<0.000000e+00> : vector<8x128xf32>
      %192 = tpu.matmul %188, %11, %cst_53 {dimension_numbers = #tpu.dot_dimension_numbers<[1], [0], [0], [1], [0, 0, 1, 1], [], []>} : vector<8x128xf32>, vector<128x128xf32>, vector<8x128xf32> -> vector<8x128xf32>
      %193 = arith.addf %192, %18 : vector<8x128xf32>
      %194 = vector.broadcast %6 : f32 to vector<8x128xf32>
      %195 = arith.mulf %194, %176 : vector<8x128xf32>
      %196 = arith.addf %195, %193 : vector<8x128xf32>
      %197 = vector.broadcast %8 : f32 to vector<8x128xf32>
      %198 = arith.mulf %196, %197 : vector<8x128xf32>
      %cst_54 = arith.constant 1.000000e+00 : f32
      %199 = vector.broadcast %cst_54 : f32 to vector<8x128xf32>
      %200 = arith.cmpf ogt, %198, %199 : vector<8x128xf32>
      %201 = arith.extui %200 : vector<8x128xi1> to vector<8x128xi32>
      %202 = arith.sitofp %201 : vector<8x128xi32> to vector<8x128xf32>
      %203 = vector.broadcast %7 : f32 to vector<8x128xf32>
      %204 = arith.mulf %203, %202 : vector<8x128xf32>
      %205 = arith.subf %196, %204 : vector<8x128xf32>
      %cst_55 = arith.constant dense<0.000000e+00> : vector<8x128xf32>
      %206 = tpu.matmul %202, %12, %cst_55 {dimension_numbers = #tpu.dot_dimension_numbers<[1], [0], [0], [1], [0, 0, 1, 1], [], []>} : vector<8x128xf32>, vector<128x128xf32>, vector<8x128xf32> -> vector<8x128xf32>
      %207 = arith.addf %179, %206 : vector<8x128xf32>
      %208 = arith.addf %207, %21 : vector<8x128xf32>
      %c6_i32 = arith.constant 6 : i32
      %209 = vector.broadcast %3 : f32 to vector<8x128xf32>
      %210 = arith.mulf %209, %191 : vector<8x128xf32>
      %211 = arith.addf %210, %34 : vector<8x128xf32>
      %212 = vector.broadcast %5 : f32 to vector<8x128xf32>
      %213 = arith.mulf %211, %212 : vector<8x128xf32>
      %cst_56 = arith.constant 1.000000e+00 : f32
      %214 = vector.broadcast %cst_56 : f32 to vector<8x128xf32>
      %215 = arith.cmpf ogt, %213, %214 : vector<8x128xf32>
      %216 = arith.extui %215 : vector<8x128xi1> to vector<8x128xi32>
      %217 = arith.sitofp %216 : vector<8x128xi32> to vector<8x128xf32>
      %218 = vector.broadcast %4 : f32 to vector<8x128xf32>
      %219 = arith.mulf %218, %217 : vector<8x128xf32>
      %220 = arith.subf %211, %219 : vector<8x128xf32>
      %cst_57 = arith.constant dense<0.000000e+00> : vector<8x128xf32>
      %221 = tpu.matmul %217, %11, %cst_57 {dimension_numbers = #tpu.dot_dimension_numbers<[1], [0], [0], [1], [0, 0, 1, 1], [], []>} : vector<8x128xf32>, vector<128x128xf32>, vector<8x128xf32> -> vector<8x128xf32>
      %222 = arith.addf %221, %18 : vector<8x128xf32>
      %223 = vector.broadcast %6 : f32 to vector<8x128xf32>
      %224 = arith.mulf %223, %205 : vector<8x128xf32>
      %225 = arith.addf %224, %222 : vector<8x128xf32>
      %226 = vector.broadcast %8 : f32 to vector<8x128xf32>
      %227 = arith.mulf %225, %226 : vector<8x128xf32>
      %cst_58 = arith.constant 1.000000e+00 : f32
      %228 = vector.broadcast %cst_58 : f32 to vector<8x128xf32>
      %229 = arith.cmpf ogt, %227, %228 : vector<8x128xf32>
      %230 = arith.extui %229 : vector<8x128xi1> to vector<8x128xi32>
      %231 = arith.sitofp %230 : vector<8x128xi32> to vector<8x128xf32>
      %232 = vector.broadcast %7 : f32 to vector<8x128xf32>
      %233 = arith.mulf %232, %231 : vector<8x128xf32>
      %234 = arith.subf %225, %233 : vector<8x128xf32>
      %cst_59 = arith.constant dense<0.000000e+00> : vector<8x128xf32>
      %235 = tpu.matmul %231, %12, %cst_59 {dimension_numbers = #tpu.dot_dimension_numbers<[1], [0], [0], [1], [0, 0, 1, 1], [], []>} : vector<8x128xf32>, vector<128x128xf32>, vector<8x128xf32> -> vector<8x128xf32>
      %236 = arith.addf %208, %235 : vector<8x128xf32>
      %237 = arith.addf %236, %21 : vector<8x128xf32>
      %c7_i32 = arith.constant 7 : i32
      %238 = vector.broadcast %3 : f32 to vector<8x128xf32>
      %239 = arith.mulf %238, %220 : vector<8x128xf32>
      %240 = arith.addf %239, %34 : vector<8x128xf32>
      %241 = vector.broadcast %5 : f32 to vector<8x128xf32>
      %242 = arith.mulf %240, %241 : vector<8x128xf32>
      %cst_60 = arith.constant 1.000000e+00 : f32
      %243 = vector.broadcast %cst_60 : f32 to vector<8x128xf32>
      %244 = arith.cmpf ogt, %242, %243 : vector<8x128xf32>
      %245 = arith.extui %244 : vector<8x128xi1> to vector<8x128xi32>
      %246 = arith.sitofp %245 : vector<8x128xi32> to vector<8x128xf32>
      %247 = vector.broadcast %4 : f32 to vector<8x128xf32>
      %248 = arith.mulf %247, %246 : vector<8x128xf32>
      %249 = arith.subf %240, %248 : vector<8x128xf32>
      %cst_61 = arith.constant dense<0.000000e+00> : vector<8x128xf32>
      %250 = tpu.matmul %246, %11, %cst_61 {dimension_numbers = #tpu.dot_dimension_numbers<[1], [0], [0], [1], [0, 0, 1, 1], [], []>} : vector<8x128xf32>, vector<128x128xf32>, vector<8x128xf32> -> vector<8x128xf32>
      %251 = arith.addf %250, %18 : vector<8x128xf32>
      %252 = vector.broadcast %6 : f32 to vector<8x128xf32>
      %253 = arith.mulf %252, %234 : vector<8x128xf32>
      %254 = arith.addf %253, %251 : vector<8x128xf32>
      %255 = vector.broadcast %8 : f32 to vector<8x128xf32>
      %256 = arith.mulf %254, %255 : vector<8x128xf32>
      %cst_62 = arith.constant 1.000000e+00 : f32
      %257 = vector.broadcast %cst_62 : f32 to vector<8x128xf32>
      %258 = arith.cmpf ogt, %256, %257 : vector<8x128xf32>
      %259 = arith.extui %258 : vector<8x128xi1> to vector<8x128xi32>
      %260 = arith.sitofp %259 : vector<8x128xi32> to vector<8x128xf32>
      %261 = vector.broadcast %7 : f32 to vector<8x128xf32>
      %262 = arith.mulf %261, %260 : vector<8x128xf32>
      %263 = arith.subf %254, %262 : vector<8x128xf32>
      %cst_63 = arith.constant dense<0.000000e+00> : vector<8x128xf32>
      %264 = tpu.matmul %260, %12, %cst_63 {dimension_numbers = #tpu.dot_dimension_numbers<[1], [0], [0], [1], [0, 0, 1, 1], [], []>} : vector<8x128xf32>, vector<128x128xf32>, vector<8x128xf32> -> vector<8x128xf32>
      %265 = arith.addf %237, %264 : vector<8x128xf32>
      %266 = arith.addf %265, %21 : vector<8x128xf32>
      %c8_i32_64 = arith.constant 8 : i32
      %267 = vector.broadcast %3 : f32 to vector<8x128xf32>
      %268 = arith.mulf %267, %249 : vector<8x128xf32>
      %269 = arith.addf %268, %34 : vector<8x128xf32>
      %270 = vector.broadcast %5 : f32 to vector<8x128xf32>
      %271 = arith.mulf %269, %270 : vector<8x128xf32>
      %cst_65 = arith.constant 1.000000e+00 : f32
      %272 = vector.broadcast %cst_65 : f32 to vector<8x128xf32>
      %273 = arith.cmpf ogt, %271, %272 : vector<8x128xf32>
      %274 = arith.extui %273 : vector<8x128xi1> to vector<8x128xi32>
      %275 = arith.sitofp %274 : vector<8x128xi32> to vector<8x128xf32>
      %276 = vector.broadcast %4 : f32 to vector<8x128xf32>
      %277 = arith.mulf %276, %275 : vector<8x128xf32>
      %278 = arith.subf %269, %277 : vector<8x128xf32>
      %cst_66 = arith.constant dense<0.000000e+00> : vector<8x128xf32>
      %279 = tpu.matmul %275, %11, %cst_66 {dimension_numbers = #tpu.dot_dimension_numbers<[1], [0], [0], [1], [0, 0, 1, 1], [], []>} : vector<8x128xf32>, vector<128x128xf32>, vector<8x128xf32> -> vector<8x128xf32>
      %280 = arith.addf %279, %18 : vector<8x128xf32>
      %281 = vector.broadcast %6 : f32 to vector<8x128xf32>
      %282 = arith.mulf %281, %263 : vector<8x128xf32>
      %283 = arith.addf %282, %280 : vector<8x128xf32>
      %284 = vector.broadcast %8 : f32 to vector<8x128xf32>
      %285 = arith.mulf %283, %284 : vector<8x128xf32>
      %cst_67 = arith.constant 1.000000e+00 : f32
      %286 = vector.broadcast %cst_67 : f32 to vector<8x128xf32>
      %287 = arith.cmpf ogt, %285, %286 : vector<8x128xf32>
      %288 = arith.extui %287 : vector<8x128xi1> to vector<8x128xi32>
      %289 = arith.sitofp %288 : vector<8x128xi32> to vector<8x128xf32>
      %290 = vector.broadcast %7 : f32 to vector<8x128xf32>
      %291 = arith.mulf %290, %289 : vector<8x128xf32>
      %292 = arith.subf %283, %291 : vector<8x128xf32>
      %cst_68 = arith.constant dense<0.000000e+00> : vector<8x128xf32>
      %293 = tpu.matmul %289, %12, %cst_68 {dimension_numbers = #tpu.dot_dimension_numbers<[1], [0], [0], [1], [0, 0, 1, 1], [], []>} : vector<8x128xf32>, vector<128x128xf32>, vector<8x128xf32> -> vector<8x128xf32>
      %294 = arith.addf %266, %293 : vector<8x128xf32>
      %295 = arith.addf %294, %21 : vector<8x128xf32>
      %c9_i32 = arith.constant 9 : i32
      %296 = vector.broadcast %3 : f32 to vector<8x128xf32>
      %297 = arith.mulf %296, %278 : vector<8x128xf32>
      %298 = arith.addf %297, %34 : vector<8x128xf32>
      %299 = vector.broadcast %5 : f32 to vector<8x128xf32>
      %300 = arith.mulf %298, %299 : vector<8x128xf32>
      %cst_69 = arith.constant 1.000000e+00 : f32
      %301 = vector.broadcast %cst_69 : f32 to vector<8x128xf32>
      %302 = arith.cmpf ogt, %300, %301 : vector<8x128xf32>
      %303 = arith.extui %302 : vector<8x128xi1> to vector<8x128xi32>
      %304 = arith.sitofp %303 : vector<8x128xi32> to vector<8x128xf32>
      %305 = vector.broadcast %4 : f32 to vector<8x128xf32>
      %306 = arith.mulf %305, %304 : vector<8x128xf32>
      %307 = arith.subf %298, %306 : vector<8x128xf32>
      %cst_70 = arith.constant dense<0.000000e+00> : vector<8x128xf32>
      %308 = tpu.matmul %304, %11, %cst_70 {dimension_numbers = #tpu.dot_dimension_numbers<[1], [0], [0], [1], [0, 0, 1, 1], [], []>} : vector<8x128xf32>, vector<128x128xf32>, vector<8x128xf32> -> vector<8x128xf32>
      %309 = arith.addf %308, %18 : vector<8x128xf32>
      %310 = vector.broadcast %6 : f32 to vector<8x128xf32>
      %311 = arith.mulf %310, %292 : vector<8x128xf32>
      %312 = arith.addf %311, %309 : vector<8x128xf32>
      %313 = vector.broadcast %8 : f32 to vector<8x128xf32>
      %314 = arith.mulf %312, %313 : vector<8x128xf32>
      %cst_71 = arith.constant 1.000000e+00 : f32
      %315 = vector.broadcast %cst_71 : f32 to vector<8x128xf32>
      %316 = arith.cmpf ogt, %314, %315 : vector<8x128xf32>
      %317 = arith.extui %316 : vector<8x128xi1> to vector<8x128xi32>
      %318 = arith.sitofp %317 : vector<8x128xi32> to vector<8x128xf32>
      %319 = vector.broadcast %7 : f32 to vector<8x128xf32>
      %320 = arith.mulf %319, %318 : vector<8x128xf32>
      %321 = arith.subf %312, %320 : vector<8x128xf32>
      %cst_72 = arith.constant dense<0.000000e+00> : vector<8x128xf32>
      %322 = tpu.matmul %318, %12, %cst_72 {dimension_numbers = #tpu.dot_dimension_numbers<[1], [0], [0], [1], [0, 0, 1, 1], [], []>} : vector<8x128xf32>, vector<128x128xf32>, vector<8x128xf32> -> vector<8x128xf32>
      %323 = arith.addf %295, %322 : vector<8x128xf32>
      %324 = arith.addf %323, %21 : vector<8x128xf32>
      %c8_i32_73 = arith.constant 8 : i32
      %325 = arith.muli %arg1, %c8_i32_73 : i32
      %326 = arith.addi %325, %arg14 : i32
      %327 = arith.cmpi slt, %326, %9 : i32
      %328 = arith.select %327, %307, %arg15 : vector<8x128xf32>
      %329 = arith.select %327, %321, %arg16 : vector<8x128xf32>
      %330 = arith.select %327, %324, %arg17 : vector<8x128xf32>
      scf.yield %328, %329, %330 : vector<8x128xf32>, vector<8x128xf32>, vector<8x128xf32>
    }
    %c8_i32_21 = arith.constant 8 : i32
    %c0_22 = arith.constant 0 : index
    %c0_23 = arith.constant 0 : index
    %27 = vector.load %arg12[%c0_22, %c0_23] : memref<8x128xf32, #tpu.memory_space<vmem>>, vector<8x128xf32>
    tpu.vector_store %arg12[%c0_22, %c0_23], %26#0 {strides = array<i32>} : memref<8x128xf32, #tpu.memory_space<vmem>>, vector<8x128xf32>,
    %c0_24 = arith.constant 0 : index
    %c0_25 = arith.constant 0 : index
    %28 = vector.load %arg13[%c0_24, %c0_25] : memref<8x128xf32, #tpu.memory_space<vmem>>, vector<8x128xf32>
    tpu.vector_store %arg13[%c0_24, %c0_25], %26#1 {strides = array<i32>} : memref<8x128xf32, #tpu.memory_space<vmem>>, vector<8x128xf32>,
    %c0_26 = arith.constant 0 : index
    %c0_27 = arith.constant 0 : index
    %29 = vector.load %arg11[%c0_26, %c0_27] : memref<8x128xf32, #tpu.memory_space<vmem>>, vector<8x128xf32>
    tpu.vector_store %arg11[%c0_26, %c0_27], %26#2 {strides = array<i32>} : memref<8x128xf32, #tpu.memory_space<vmem>>, vector<8x128xf32>,
    return
  }
  func.func @transform_0(%arg0: i32, %arg1: i32) -> i32 {
    %c0_i32 = arith.constant 0 : i32
    %c0_i32_0 = arith.constant 0 : i32
    return %c0_i32 : i32
  }
  func.func @transform_1(%arg0: i32, %arg1: i32) -> i32 {
    %c0_i32 = arith.constant 0 : i32
    %c0_i32_0 = arith.constant 0 : i32
    return %c0_i32 : i32
  }
  func.func @transform_2(%arg0: i32, %arg1: i32) -> (i32, i32, i32) {
    %c0_i32 = arith.constant 0 : i32
    %c0_i32_0 = arith.constant 0 : i32
    return %arg1, %arg0, %c0_i32 : i32, i32, i32
  }
  func.func @transform_3(%arg0: i32, %arg1: i32) -> (i32, i32) {
    %c0_i32 = arith.constant 0 : i32
    %c0_i32_0 = arith.constant 0 : i32
    %c0_i32_1 = arith.constant 0 : i32
    return %c0_i32, %c0_i32_0 : i32, i32
  }
  func.func @transform_4(%arg0: i32, %arg1: i32) -> (i32, i32) {
    %c0_i32 = arith.constant 0 : i32
    %c0_i32_0 = arith.constant 0 : i32
    %c0_i32_1 = arith.constant 0 : i32
    return %c0_i32, %c0_i32_0 : i32, i32
  }
  func.func @transform_5(%arg0: i32, %arg1: i32) -> (i32, i32) {
    %c0_i32 = arith.constant 0 : i32
    %c0_i32_0 = arith.constant 0 : i32
    %c0_i32_1 = arith.constant 0 : i32
    return %c0_i32, %c0_i32_0 : i32, i32
  }
  func.func @transform_6(%arg0: i32, %arg1: i32) -> (i32, i32) {
    %c0_i32 = arith.constant 0 : i32
    %c0_i32_0 = arith.constant 0 : i32
    %c0_i32_1 = arith.constant 0 : i32
    return %c0_i32, %c0_i32_0 : i32, i32
  }
  func.func @transform_7(%arg0: i32, %arg1: i32) -> (i32, i32) {
    %c0_i32 = arith.constant 0 : i32
    %c0_i32_0 = arith.constant 0 : i32
    %c0_i32_1 = arith.constant 0 : i32
    return %c0_i32, %c0_i32_0 : i32, i32
  }
  func.func @transform_8(%arg0: i32, %arg1: i32) -> (i32, i32) {
    %c0_i32 = arith.constant 0 : i32
    %c0_i32_0 = arith.constant 0 : i32
    %c0_i32_1 = arith.constant 0 : i32
    return %c0_i32, %c0_i32_0 : i32, i32
  }
  func.func @transform_9(%arg0: i32, %arg1: i32) -> (i32, i32) {
    %c0_i32 = arith.constant 0 : i32
    %c0_i32_0 = arith.constant 0 : i32
    return %arg0, %c0_i32 : i32, i32
  }
}

</mosaic_0001>

<llo_original>
// kernel: tpu_custom_call.1
$region0: #{tpu_custom_call.1}
  #allocation0 [shape = 'u32[]', space=smem, size = 0x4, offset = 0x4, fixed_abs, tag = 'smem constant byte address 0x4 - core index']
  #allocation1 [shape = 'u32[144,128]{1,0:T(1,128)}', space=vmem, size = 0x12000, scoped, tag = 'internal scratch']
  #allocation2 [shape = 'f32[8,128]{1,0:T(8,128)}', space=vmem, size = 0x1000, scoped, tag = 'scratch operand']
  #allocation3 [shape = 'f32[8,128]{1,0:T(8,128)}', space=vmem, size = 0x1000, scoped, tag = 'scratch operand']
  #allocation4 [shape = 's32[1]{0:T(128)S(6)}', space=smem, size = 0x200, scoped, tag = 'scoped memory for tpu_custom_call.1']
  %s0 = inlined_call_operand.vmem [shape: f32[6], index: 0, kind: input, shape index: {}]
  %s1 = inlined_call_operand.<no memory space> [shape: s32[1], index: 1, kind: input, shape index: {}]
  %s2 = inlined_call_operand.hbm [shape: f32[8,8,100], index: 2, kind: input, shape index: {}]
  %s3 = inlined_call_operand.hbm [shape: f32[100,128], index: 3, kind: input, shape index: {}]
  %s4 = inlined_call_operand.vmem [shape: f32[1,128], index: 4, kind: input, shape index: {}]
  %s5 = inlined_call_operand.hbm [shape: f32[128,128], index: 5, kind: input, shape index: {}]
  %s6 = inlined_call_operand.vmem [shape: f32[1,128], index: 6, kind: input, shape index: {}]
  %s7 = inlined_call_operand.hbm [shape: f32[128,128], index: 7, kind: input, shape index: {}]
  %s8 = inlined_call_operand.vmem [shape: f32[1,128], index: 8, kind: input, shape index: {}]
  %s9 = inlined_call_operand.hbm [shape: f32[8,128], index: 9, kind: output, shape index: {}]
  %s10 = sld [smem:[#allocation0]]
  $region77: #{tpu_custom_call.1} parent=0
    _
  %s12 = ssub.s32 1, %s10
  %s13 = scalar_select 0, %s12, %s10
  %14 = sst [smem:[#allocation4]] %s1
  $region1: #{tpu_custom_call.1} parent=0
    #allocation5 [shape = 'u8[512]{0}', space=smem, size = 0x200, scoped, tag = 'input window, operand 0, single buffered']
    #allocation6 [shape = 's32[1]{0}', space=sflag, size = 0x4, scoped, tag = 'scoped memory for tpu_custom_call.1']
    #allocation7 [shape = 's32[1]{0}', space=sflag, size = 0x4, scoped, tag = 'scoped memory for tpu_custom_call.1']
    #allocation8 [shape = 's32[1]{0}', space=sflag, size = 0x4, scoped, tag = 'scoped memory for tpu_custom_call.1']
    #allocation9 [shape = 'u8[32768]{0}', space=vmem, size = 0x8000, scoped, tag = 'input window, operand 2, single buffered']
    #allocation10 [shape = 'u8[53248]{0}', space=vmem, size = 0xd000, scoped, tag = 'input window, operand 3, single buffered']
    #allocation11 [shape = 's32[1]{0}', space=sflag, size = 0x4, scoped, tag = 'scoped memory for tpu_custom_call.1']
    #allocation12 [shape = 'u8[65536]{0}', space=vmem, size = 0x10000, scoped, tag = 'input window, operand 5, single buffered']
    #allocation13 [shape = 'u8[65536]{0}', space=vmem, size = 0x10000, scoped, tag = 'input window, operand 7, single buffered']
    #allocation14 [shape = 's32[1]{0}', space=sflag, size = 0x4, scoped, tag = 'scoped memory for tpu_custom_call.1']
    #allocation15 [shape = 'u8[4096]{0}', space=vmem, size = 0x1000, scoped, tag = 'output window, operand 0, single buffered']
    %15 = vsyncpa [#allocation8], 0
    %16 = vsyncpa [#allocation6], 0
    %17 = vsyncpa [#allocation11], 0
    %18 = vsyncpa [#allocation14], 0
    %19 = vsyncpa [#allocation7], 0
    // Predicated region
    $region2: #{tpu_custom_call.1} parent=1 // pred_check
      _
    $region3: #{tpu_custom_call.1} parent=1 // pred_check_branch
      %21 = sbr.rel (0) target = $region5
    $region4: #{tpu_custom_call.1} parent=1 // pred_region
      %s23 = ssub.s32 16, 16
      %24 = vsyncadd [#allocation8], %s23
      %s26 = sshll.u32 %s0, 4
      %s27 = int_to_ptr.vmem [resolvable:$true] %s26
      %29 = dma.vmem_to_smem %s27, 16, [#allocation5], [#allocation8]
    $region5: #{tpu_custom_call.1} parent=1 // pred_fallthru
      _
    // Predicated region
    $region6: #{tpu_custom_call.1} parent=1 // pred_check
      _
    $region7: #{tpu_custom_call.1} parent=1 // pred_check_branch
      %31 = sbr.rel (0) target = $region9
    $region8: #{tpu_custom_call.1} parent=1 // pred_region
      _
    $region9: #{tpu_custom_call.1} parent=1 // pred_fallthru
      _
    // Predicated region
    $region10: #{tpu_custom_call.1} parent=1 // pred_check
      _
    $region11: #{tpu_custom_call.1} parent=1 // pred_check_branch
      %33 = sbr.rel (0) target = $region13
    $region12: #{tpu_custom_call.1} parent=1 // pred_region
      %s35 = ssub.s32 1024, 1024
      %36 = vsyncadd [#allocation6], %s35
      %s37 = sshll.u32 [#allocation9], 4
      %s38 = int_to_ptr.vmem [resolvable:$true] %s37
      %43 = dma.hbm_to_vmem [thread:$0]  %s2, 1024, %s38, [#allocation6], 128, 128, 8
    $region13: #{tpu_custom_call.1} parent=1 // pred_fallthru
      _
    // Predicated region
    $region14: #{tpu_custom_call.1} parent=1 // pred_check
      _
    $region15: #{tpu_custom_call.1} parent=1 // pred_check_branch
      %45 = sbr.rel (0) target = $region17
    $region16: #{tpu_custom_call.1} parent=1 // pred_region
      %s47 = ssub.s32 1664, 1664
      %48 = vsyncadd [#allocation11], %s47
      %s49 = sshll.u32 [#allocation10], 4
      %s50 = int_to_ptr.vmem [resolvable:$true] %s49
      %55 = dma.hbm_to_vmem [thread:$0]  %s3, 1664, %s50, [#allocation11], 128, 128, 8
    $region17: #{tpu_custom_call.1} parent=1 // pred_fallthru
      _
    // Predicated region
    $region18: #{tpu_custom_call.1} parent=1 // pred_check
      _
    $region19: #{tpu_custom_call.1} parent=1 // pred_check_branch
      %57 = sbr.rel (0) target = $region21
    $region20: #{tpu_custom_call.1} parent=1 // pred_region
      _
    $region21: #{tpu_custom_call.1} parent=1 // pred_fallthru
      _
    // Predicated region
    $region22: #{tpu_custom_call.1} parent=1 // pred_check
      _
    $region23: #{tpu_custom_call.1} parent=1 // pred_check_branch
      %59 = sbr.rel (0) target = $region25
    $region24: #{tpu_custom_call.1} parent=1 // pred_region
      %s61 = ssub.s32 2048, 2048
      %62 = vsyncadd [#allocation11], %s61
      %s63 = sshll.u32 [#allocation12], 4
      %s64 = int_to_ptr.vmem [resolvable:$true] %s63
      %69 = dma.hbm_to_vmem [thread:$0]  %s5, 2048, %s64, [#allocation11], 128, 128, 8
    $region25: #{tpu_custom_call.1} parent=1 // pred_fallthru
      _
    // Predicated region
    $region26: #{tpu_custom_call.1} parent=1 // pred_check
      _
    $region27: #{tpu_custom_call.1} parent=1 // pred_check_branch
      %71 = sbr.rel (0) target = $region29
    $region28: #{tpu_custom_call.1} parent=1 // pred_region
      _
    $region29: #{tpu_custom_call.1} parent=1 // pred_fallthru
      _
    // Predicated region
    $region30: #{tpu_custom_call.1} parent=1 // pred_check
      _
    $region31: #{tpu_custom_call.1} parent=1 // pred_check_branch
      %73 = sbr.rel (0) target = $region33
    $region32: #{tpu_custom_call.1} parent=1 // pred_region
      %s75 = ssub.s32 2048, 2048
      %76 = vsyncadd [#allocation14], %s75
      %s77 = sshll.u32 [#allocation13], 4
      %s78 = int_to_ptr.vmem [resolvable:$true] %s77
      %83 = dma.hbm_to_vmem [thread:$0]  %s7, 2048, %s78, [#allocation14], 128, 128, 8
    $region33: #{tpu_custom_call.1} parent=1 // pred_fallthru
      _
    // Predicated region
    $region34: #{tpu_custom_call.1} parent=1 // pred_check
      _
    $region35: #{tpu_custom_call.1} parent=1 // pred_check_branch
      %85 = sbr.rel (0) target = $region37
    $region36: #{tpu_custom_call.1} parent=1 // pred_region
      _
    $region37: #{tpu_custom_call.1} parent=1 // pred_fallthru
      _
    // Predicated region
    $region38: #{tpu_custom_call.1} parent=1 // pred_check
      _
    $region39: #{tpu_custom_call.1} parent=1 // pred_check_branch
      %87 = sbr.rel (0) target = $region41
    $region40: #{tpu_custom_call.1} parent=1 // pred_region
      %88 = dma.done [#allocation8], 16
    $region41: #{tpu_custom_call.1} parent=1 // pred_fallthru
      _
    // Predicated region
    $region42: #{tpu_custom_call.1} parent=1 // pred_check
      _
    $region43: #{tpu_custom_call.1} parent=1 // pred_check_branch
      %90 = sbr.rel (0) target = $region45
    $region44: #{tpu_custom_call.1} parent=1 // pred_region
      %91 = dma.done [#allocation6], 1024
    $region45: #{tpu_custom_call.1} parent=1 // pred_fallthru
      _
    // Predicated region
    $region46: #{tpu_custom_call.1} parent=1 // pred_check
      _
    $region47: #{tpu_custom_call.1} parent=1 // pred_check_branch
      %93 = sbr.rel (0) target = $region49
    $region48: #{tpu_custom_call.1} parent=1 // pred_region
      %94 = dma.done [#allocation11], 1664
    $region49: #{tpu_custom_call.1} parent=1 // pred_fallthru
      _
    // Predicated region
    $region50: #{tpu_custom_call.1} parent=1 // pred_check
      _
    $region51: #{tpu_custom_call.1} parent=1 // pred_check_branch
      %96 = sbr.rel (0) target = $region53
    $region52: #{tpu_custom_call.1} parent=1 // pred_region
      %97 = dma.done [#allocation11], 2048
    $region53: #{tpu_custom_call.1} parent=1 // pred_fallthru
      _
    // Predicated region
    $region54: #{tpu_custom_call.1} parent=1 // pred_check
      _
    $region55: #{tpu_custom_call.1} parent=1 // pred_check_branch
      %99 = sbr.rel (0) target = $region57
    $region56: #{tpu_custom_call.1} parent=1 // pred_region
      %100 = dma.done [#allocation14], 2048
    $region57: #{tpu_custom_call.1} parent=1 // pred_fallthru
      _
    %101 = sfence
    %p102 = scmp.eq.s32.totalorder 0, 0
    // Predicated region
    $region58: #{tpu_custom_call.1} parent=1 // pred_check
      %p103 = pneg %p102
    $region59: #{tpu_custom_call.1} parent=1 // pred_check_branch
      %105 = sbr.rel (%p103) target = $region61
    $region60: #{tpu_custom_call.1} parent=1 // pred_region
      %106 = vst [vmem:[#allocation2] sm:$0xff] 0.0
      %107 = vst [vmem:[#allocation3] sm:$0xff] 0.0
      %108 = vst [vmem:[#allocation15] sm:$0xff] 0.0
    $region61: #{tpu_custom_call.1} parent=1 // pred_fallthru
      _
    %s109 = sld [smem:[#allocation5]]
    %s110 = sld [smem:[#allocation5 + $0x1]]
    %s111 = sld [smem:[#allocation5 + $0x2]]
    %s112 = sld [smem:[#allocation5 + $0x3]]
    %s113 = sld [smem:[#allocation5 + $0x4]]
    %s114 = sld [smem:[#allocation5 + $0x5]]
    %s115 = sld [smem:[#allocation4]]
    %v116 = vld [vmem:[#allocation10] sm:$0xff]
    %v117 = vld [vmem:[#allocation10 + $0x8] sm:$0xff]
    %v118 = vld [vmem:[#allocation10 + $0x10] sm:$0xff]
    %v119 = vld [vmem:[#allocation10 + $0x18] sm:$0xff]
    %v120 = vld [vmem:[#allocation10 + $0x20] sm:$0xff]
    %v121 = vld [vmem:[#allocation10 + $0x28] sm:$0xff]
    %v122 = vld [vmem:[#allocation10 + $0x30] sm:$0xff]
    %v123 = vld [vmem:[#allocation10 + $0x38] sm:$0xff]
    %v124 = vld [vmem:[#allocation10 + $0x40] sm:$0xff]
    %v125 = vld [vmem:[#allocation10 + $0x48] sm:$0xff]
    %v126 = vld [vmem:[#allocation10 + $0x50] sm:$0xff]
    %v127 = vld [vmem:[#allocation10 + $0x58] sm:$0xff]
    %v128 = vld [vmem:[#allocation10 + $0x60] sm:$0xf]
    %v129 = vld [vmem:[#allocation12] sm:$0xff]
    %v130 = vld [vmem:[#allocation12 + $0x8] sm:$0xff]
    %v131 = vld [vmem:[#allocation12 + $0x10] sm:$0xff]
    %v132 = vld [vmem:[#allocation12 + $0x18] sm:$0xff]
    %v133 = vld [vmem:[#allocation12 + $0x20] sm:$0xff]
    %v134 = vld [vmem:[#allocation12 + $0x28] sm:$0xff]
    %v135 = vld [vmem:[#allocation12 + $0x30] sm:$0xff]
    %v136 = vld [vmem:[#allocation12 + $0x38] sm:$0xff]
    %v137 = vld [vmem:[#allocation12 + $0x40] sm:$0xff]
    %v138 = vld [vmem:[#allocation12 + $0x48] sm:$0xff]
    %v139 = vld [vmem:[#allocation12 + $0x50] sm:$0xff]
    %v140 = vld [vmem:[#allocation12 + $0x58] sm:$0xff]
    %v141 = vld [vmem:[#allocation12 + $0x60] sm:$0xff]
    %v142 = vld [vmem:[#allocation12 + $0x68] sm:$0xff]
    %v143 = vld [vmem:[#allocation12 + $0x70] sm:$0xff]
    %v144 = vld [vmem:[#allocation12 + $0x78] sm:$0xff]
    %v145 = vld [vmem:[#allocation13] sm:$0xff]
    %v146 = vld [vmem:[#allocation13 + $0x8] sm:$0xff]
    %v147 = vld [vmem:[#allocation13 + $0x10] sm:$0xff]
    %v148 = vld [vmem:[#allocation13 + $0x18] sm:$0xff]
    %v149 = vld [vmem:[#allocation13 + $0x20] sm:$0xff]
    %v150 = vld [vmem:[#allocation13 + $0x28] sm:$0xff]
    %v151 = vld [vmem:[#allocation13 + $0x30] sm:$0xff]
    %v152 = vld [vmem:[#allocation13 + $0x38] sm:$0xff]
    %v153 = vld [vmem:[#allocation13 + $0x40] sm:$0xff]
    %v154 = vld [vmem:[#allocation13 + $0x48] sm:$0xff]
    %v155 = vld [vmem:[#allocation13 + $0x50] sm:$0xff]
    %v156 = vld [vmem:[#allocation13 + $0x58] sm:$0xff]
    %v157 = vld [vmem:[#allocation13 + $0x60] sm:$0xff]
    %v158 = vld [vmem:[#allocation13 + $0x68] sm:$0xff]
    %v159 = vld [vmem:[#allocation13 + $0x70] sm:$0xff]
    %v160 = vld [vmem:[#allocation13 + $0x78] sm:$0xff]
    %v161 = vld [vmem:[%s4] sm:$0x1]
    %v163 = vlaneseq
    %v164 = vshrl.u32 %v163, 7
    %v165 = vsub.s32 0, %v164
    %v166 = vrot.slane %v161, %v165
    %v168 = vld [vmem:[%s6] sm:$0x1]
    %v170 = vlaneseq
    %v171 = vshrl.u32 %v170, 7
    %v172 = vsub.s32 0, %v171
    %v173 = vrot.slane %v168, %v172
    %v175 = vld [vmem:[%s8] sm:$0x1]
    %v177 = vlaneseq
    %v178 = vshrl.u32 %v177, 7
    %v179 = vsub.s32 0, %v178
    %v180 = vrot.slane %v175, %v179
    %v182 = vld [vmem:[#allocation2] sm:$0xff]
    %v183 = vld [vmem:[#allocation3] sm:$0xff]
    %v184 = vld [vmem:[#allocation15] sm:$0xff]
    loop: start=0, step=1, limit=8
    $region62: #{tpu_custom_call.1} parent=1 // loop_pre_header
      _
    $region63: #{tpu_custom_call.1} parent=1 // loop_header
      %s186 = sphi 0, %s190
      %p187 = scmp.ge.s32.totalorder %s186, 8
      %v191 = vphi %v182, %v1867
      %v192 = vphi %v183, %v1868
      %v193 = vphi %v184, %v1869
    $region64: #{tpu_custom_call.1} parent=1 // loop_header_branch
      %189 = sbr.rel (%p187) target = $region68
    $region65: #{tpu_custom_call.1} parent=1 // loop_body
      %s194 = smul.u32 %s186, 8
      %s195 = scalar_lea.vmem [#allocation9], %s194
      %v196 = vld [vmem:[%s195] sm:$0xff]
      %vm197 = vcmask 818176
      %v199 = vsel %vm197, %v196, 0
      %vm201 = vcmask 1043456
      %v203 = vsel %vm201, %v128, 0
      %205 = vmatprep.subr.mxu0 0.0
      %206 = vmatpush1.msra.mxu0 0.0
      %207 = vmatprep.subr.mxu0 0.0
      %208 = vmatpush1.msra.mxu0 0.0
      %209 = vmatprep.subr.mxu0 0.0
      %210 = vmatpush1.msra.mxu0 0.0
      %211 = vmatprep.subr.mxu0 0.0
      %212 = vmatpush1.msra.mxu0 %v203
      %213 = vmatprep.subr.mxu0 0.0
      %214 = vmatpush1.msra.mxu0 %v127
      %215 = vmatprep.subr.mxu0 0.0
      %216 = vmatpush1.msra.mxu0 %v126
      %217 = vmatprep.subr.mxu0 0.0
      %218 = vmatpush1.msra.mxu0 %v125
      %219 = vmatprep.subr.mxu0 0.0
      %220 = vmatpush1.msra.mxu0 %v124
      %221 = vmatprep.subr.mxu0 0.0
      %222 = vmatpush1.msra.mxu0 %v123
      %223 = vmatprep.subr.mxu0 0.0
      %224 = vmatpush1.msra.mxu0 %v122
      %225 = vmatprep.subr.mxu0 0.0
      %226 = vmatpush1.msra.mxu0 %v121
      %227 = vmatprep.subr.mxu0 0.0
      %228 = vmatpush1.msra.mxu0 %v120
      %229 = vmatprep.subr.mxu0 0.0
      %230 = vmatpush1.msra.mxu0 %v119
      %231 = vmatprep.subr.mxu0 0.0
      %232 = vmatpush1.msra.mxu0 %v118
      %233 = vmatprep.subr.mxu0 0.0
      %234 = vmatpush1.msra.mxu0 %v117
      %235 = vmatprep.subr.mxu0 0.0
      %236 = vmatpush1.msra.mxu0 %v116
      %237 = vmatprep.subr.mxu0 0.0
      %238 = vmatpush2.msra.mxu0 0.0
      %239 = vmatprep.subr.mxu0 0.0
      %240 = vmatpush2.msra.mxu0 0.0
      %241 = vmatprep.subr.mxu0 0.0
      %242 = vmatpush2.msra.mxu0 0.0
      %243 = vmatprep.subr.mxu0 0.0
      %244 = vmatpush2.msra.mxu0 0.0
      %245 = vmatprep.subr.mxu0 0.0
      %246 = vmatpush2.msra.mxu0 0.0
      %247 = vmatprep.subr.mxu0 0.0
      %248 = vmatpush2.msra.mxu0 0.0
      %249 = vmatprep.subr.mxu0 0.0
      %250 = vmatpush2.msra.mxu0 0.0
      %251 = vmatprep.subr.mxu0 0.0
      %252 = vmatpush2.msra.mxu0 0.0
      %253 = vmatprep.subr.mxu0 0.0
      %254 = vmatpush2.msra.mxu0 0.0
      %255 = vmatprep.subr.mxu0 0.0
      %256 = vmatpush2.msra.mxu0 0.0
      %257 = vmatprep.subr.mxu0 0.0
      %258 = vmatpush2.msra.mxu0 0.0
      %259 = vmatprep.subr.mxu0 0.0
      %260 = vmatpush2.msra.mxu0 0.0
      %261 = vmatprep.subr.mxu0 0.0
      %262 = vmatpush2.msra.mxu0 0.0
      %263 = vmatprep.subr.mxu0 0.0
      %264 = vmatpush2.msra.mxu0 0.0
      %265 = vmatprep.subr.mxu0 0.0
      %266 = vmatpush2.msra.mxu0 0.0
      %267 = vmatprep.subr.mxu0 0.0
      %268 = vmatpush2.msra.mxu0 0.0
      %269 = vmatprep.mubr.f32.mxu0 0.0
      %270 = vmatmul.mubr.f32.gmra.mxu0 %v199
      %v271 = vpop.f32.mrf.mxu0
      %v272 = vadd.f32 %v166, %v271
      %v273 = vpop.f32.mrf.mxu0
      %274 = vdwg.mxu0
      %v275 = vstv %s109
      %v276 = vmul.f32 %v275, %v191
      %v277 = vadd.f32 %v276, %v272
      %v278 = vstv %s111
      %v279 = vmul.f32 %v277, %v278
      %vm280 = vcmp.gt.f32.partialorder %v279, 1.0
      %v281 = vsel %vm280, 1, 0
      %v282 = vcvt.s32.f32 %v281
      %v283 = vstv %s110
      %v284 = vmul.f32 %v283, %v282
      %v285 = vsub.f32 %v277, %v284
      %286 = vmatprep.subr.mxu0 0.0
      %287 = vmatpush1.msra.mxu0 %v144
      %288 = vmatprep.subr.mxu0 0.0
      %289 = vmatpush1.msra.mxu0 %v143
      %290 = vmatprep.subr.mxu0 0.0
      %291 = vmatpush1.msra.mxu0 %v142
      %292 = vmatprep.subr.mxu0 0.0
      %293 = vmatpush1.msra.mxu0 %v141
      %294 = vmatprep.subr.mxu0 0.0
      %295 = vmatpush1.msra.mxu0 %v140
      %296 = vmatprep.subr.mxu0 0.0
      %297 = vmatpush1.msra.mxu0 %v139
      %298 = vmatprep.subr.mxu0 0.0
      %299 = vmatpush1.msra.mxu0 %v138
      %300 = vmatprep.subr.mxu0 0.0
      %301 = vmatpush1.msra.mxu0 %v137
      %302 = vmatprep.subr.mxu0 0.0
      %303 = vmatpush1.msra.mxu0 %v136
      %304 = vmatprep.subr.mxu0 0.0
      %305 = vmatpush1.msra.mxu0 %v135
      %306 = vmatprep.subr.mxu0 0.0
      %307 = vmatpush1.msra.mxu0 %v134
      %308 = vmatprep.subr.mxu0 0.0
      %309 = vmatpush1.msra.mxu0 %v133
      %310 = vmatprep.subr.mxu0 0.0
      %311 = vmatpush1.msra.mxu0 %v132
      %312 = vmatprep.subr.mxu0 0.0
      %313 = vmatpush1.msra.mxu0 %v131
      %314 = vmatprep.subr.mxu0 0.0
      %315 = vmatpush1.msra.mxu0 %v130
      %316 = vmatprep.subr.mxu0 0.0
      %317 = vmatpush1.msra.mxu0 %v129
      %318 = vmatprep.subr.mxu0 0.0
      %319 = vmatpush2.msra.mxu0 0.0
      %320 = vmatprep.subr.mxu0 0.0
      %321 = vmatpush2.msra.mxu0 0.0
      %322 = vmatprep.subr.mxu0 0.0
      %323 = vmatpush2.msra.mxu0 0.0
      %324 = vmatprep.subr.mxu0 0.0
      %325 = vmatpush2.msra.mxu0 0.0
      %326 = vmatprep.subr.mxu0 0.0
      %327 = vmatpush2.msra.mxu0 0.0
      %328 = vmatprep.subr.mxu0 0.0
      %329 = vmatpush2.msra.mxu0 0.0
      %330 = vmatprep.subr.mxu0 0.0
      %331 = vmatpush2.msra.mxu0 0.0
      %332 = vmatprep.subr.mxu0 0.0
      %333 = vmatpush2.msra.mxu0 0.0
      %334 = vmatprep.subr.mxu0 0.0
      %335 = vmatpush2.msra.mxu0 0.0
      %336 = vmatprep.subr.mxu0 0.0
      %337 = vmatpush2.msra.mxu0 0.0
      %338 = vmatprep.subr.mxu0 0.0
      %339 = vmatpush2.msra.mxu0 0.0
      %340 = vmatprep.subr.mxu0 0.0
      %341 = vmatpush2.msra.mxu0 0.0
      %342 = vmatprep.subr.mxu0 0.0
      %343 = vmatpush2.msra.mxu0 0.0
      %344 = vmatprep.subr.mxu0 0.0
      %345 = vmatpush2.msra.mxu0 0.0
      %346 = vmatprep.subr.mxu0 0.0
      %347 = vmatpush2.msra.mxu0 0.0
      %348 = vmatprep.subr.mxu0 0.0
      %349 = vmatpush2.msra.mxu0 0.0
      %350 = vmatprep.mubr.f32.mxu0 0.0
      %351 = vmatmul.mubr.f32.gmra.mxu0 %v282
      %v352 = vpop.f32.mrf.mxu0
      %v353 = vadd.f32 %v173, %v352
      %v354 = vpop.f32.mrf.mxu0
      %355 = vdwg.mxu0
      %v356 = vstv %s112
      %v357 = vmul.f32 %v356, %v192
      %v358 = vadd.f32 %v357, %v353
      %v359 = vstv %s114
      %v360 = vmul.f32 %v358, %v359
      %vm361 = vcmp.gt.f32.partialorder %v360, 1.0
      %v362 = vsel %vm361, 1, 0
      %v363 = vcvt.s32.f32 %v362
      %v364 = vstv %s113
      %v365 = vmul.f32 %v364, %v363
      %v366 = vsub.f32 %v358, %v365
      %367 = vmatprep.subr.mxu0 0.0
      %368 = vmatpush1.msra.mxu0 %v160
      %369 = vmatprep.subr.mxu0 0.0
      %370 = vmatpush1.msra.mxu0 %v159
      %371 = vmatprep.subr.mxu0 0.0
      %372 = vmatpush1.msra.mxu0 %v158
      %373 = vmatprep.subr.mxu0 0.0
      %374 = vmatpush1.msra.mxu0 %v157
      %375 = vmatprep.subr.mxu0 0.0
      %376 = vmatpush1.msra.mxu0 %v156
      %377 = vmatprep.subr.mxu0 0.0
      %378 = vmatpush1.msra.mxu0 %v155
      %379 = vmatprep.subr.mxu0 0.0
      %380 = vmatpush1.msra.mxu0 %v154
      %381 = vmatprep.subr.mxu0 0.0
      %382 = vmatpush1.msra.mxu0 %v153
      %383 = vmatprep.subr.mxu0 0.0
      %384 = vmatpush1.msra.mxu0 %v152
      %385 = vmatprep.subr.mxu0 0.0
      %386 = vmatpush1.msra.mxu0 %v151
      %387 = vmatprep.subr.mxu0 0.0
      %388 = vmatpush1.msra.mxu0 %v150
      %389 = vmatprep.subr.mxu0 0.0
      %390 = vmatpush1.msra.mxu0 %v149
      %391 = vmatprep.subr.mxu0 0.0
      %392 = vmatpush1.msra.mxu0 %v148
      %393 = vmatprep.subr.mxu0 0.0
      %394 = vmatpush1.msra.mxu0 %v147
      %395 = vmatprep.subr.mxu0 0.0
      %396 = vmatpush1.msra.mxu0 %v146
      %397 = vmatprep.subr.mxu0 0.0
      %398 = vmatpush1.msra.mxu0 %v145
      %399 = vmatprep.subr.mxu0 0.0
      %400 = vmatpush2.msra.mxu0 0.0
      %401 = vmatprep.subr.mxu0 0.0
      %402 = vmatpush2.msra.mxu0 0.0
      %403 = vmatprep.subr.mxu0 0.0
      %404 = vmatpush2.msra.mxu0 0.0
      %405 = vmatprep.subr.mxu0 0.0
      %406 = vmatpush2.msra.mxu0 0.0
      %407 = vmatprep.subr.mxu0 0.0
      %408 = vmatpush2.msra.mxu0 0.0
      %409 = vmatprep.subr.mxu0 0.0
      %410 = vmatpush2.msra.mxu0 0.0
      %411 = vmatprep.subr.mxu0 0.0
      %412 = vmatpush2.msra.mxu0 0.0
      %413 = vmatprep.subr.mxu0 0.0
      %414 = vmatpush2.msra.mxu0 0.0
      %415 = vmatprep.subr.mxu0 0.0
      %416 = vmatpush2.msra.mxu0 0.0
      %417 = vmatprep.subr.mxu0 0.0
      %418 = vmatpush2.msra.mxu0 0.0
      %419 = vmatprep.subr.mxu0 0.0
      %420 = vmatpush2.msra.mxu0 0.0
      %421 = vmatprep.subr.mxu0 0.0
      %422 = vmatpush2.msra.mxu0 0.0
      %423 = vmatprep.subr.mxu0 0.0
      %424 = vmatpush2.msra.mxu0 0.0
      %425 = vmatprep.subr.mxu0 0.0
      %426 = vmatpush2.msra.mxu0 0.0
      %427 = vmatprep.subr.mxu0 0.0
      %428 = vmatpush2.msra.mxu0 0.0
      %429 = vmatprep.subr.mxu0 0.0
      %430 = vmatpush2.msra.mxu0 0.0
      %431 = vmatprep.mubr.f32.mxu0 0.0
      %432 = vmatmul.mubr.f32.gmra.mxu0 %v363
      %v433 = vpop.f32.mrf.mxu0
      %v434 = vadd.f32 0.0, %v433
      %v435 = vpop.f32.mrf.mxu0
      %436 = vdwg.mxu0
      %v437 = vadd.f32 %v193, %v434
      %v438 = vadd.f32 %v437, %v180
      %v439 = vmul.f32 %v275, %v285
      %v440 = vadd.f32 %v439, %v272
      %v441 = vmul.f32 %v440, %v278
      %vm442 = vcmp.gt.f32.partialorder %v441, 1.0
      %v443 = vsel %vm442, 1, 0
      %v444 = vcvt.s32.f32 %v443
      %v445 = vmul.f32 %v283, %v444
      %v446 = vsub.f32 %v440, %v445
      %447 = vmatprep.subr.mxu0 0.0
      %448 = vmatpush1.msra.mxu0 %v144
      %449 = vmatprep.subr.mxu0 0.0
      %450 = vmatpush1.msra.mxu0 %v143
      %451 = vmatprep.subr.mxu0 0.0
      %452 = vmatpush1.msra.mxu0 %v142
      %453 = vmatprep.subr.mxu0 0.0
      %454 = vmatpush1.msra.mxu0 %v141
      %455 = vmatprep.subr.mxu0 0.0
      %456 = vmatpush1.msra.mxu0 %v140
      %457 = vmatprep.subr.mxu0 0.0
      %458 = vmatpush1.msra.mxu0 %v139
      %459 = vmatprep.subr.mxu0 0.0
      %460 = vmatpush1.msra.mxu0 %v138
      %461 = vmatprep.subr.mxu0 0.0
      %462 = vmatpush1.msra.mxu0 %v137
      %463 = vmatprep.subr.mxu0 0.0
      %464 = vmatpush1.msra.mxu0 %v136
      %465 = vmatprep.subr.mxu0 0.0
      %466 = vmatpush1.msra.mxu0 %v135
      %467 = vmatprep.subr.mxu0 0.0
      %468 = vmatpush1.msra.mxu0 %v134
      %469 = vmatprep.subr.mxu0 0.0
      %470 = vmatpush1.msra.mxu0 %v133
      %471 = vmatprep.subr.mxu0 0.0
      %472 = vmatpush1.msra.mxu0 %v132
      %473 = vmatprep.subr.mxu0 0.0
      %474 = vmatpush1.msra.mxu0 %v131
      %475 = vmatprep.subr.mxu0 0.0
      %476 = vmatpush1.msra.mxu0 %v130
      %477 = vmatprep.subr.mxu0 0.0
      %478 = vmatpush1.msra.mxu0 %v129
      %479 = vmatprep.subr.mxu0 0.0
      %480 = vmatpush2.msra.mxu0 0.0
      %481 = vmatprep.subr.mxu0 0.0
      %482 = vmatpush2.msra.mxu0 0.0
      %483 = vmatprep.subr.mxu0 0.0
      %484 = vmatpush2.msra.mxu0 0.0
      %485 = vmatprep.subr.mxu0 0.0
      %486 = vmatpush2.msra.mxu0 0.0
      %487 = vmatprep.subr.mxu0 0.0
      %488 = vmatpush2.msra.mxu0 0.0
      %489 = vmatprep.subr.mxu0 0.0
      %490 = vmatpush2.msra.mxu0 0.0
      %491 = vmatprep.subr.mxu0 0.0
      %492 = vmatpush2.msra.mxu0 0.0
      %493 = vmatprep.subr.mxu0 0.0
      %494 = vmatpush2.msra.mxu0 0.0
      %495 = vmatprep.subr.mxu0 0.0
      %496 = vmatpush2.msra.mxu0 0.0
      %497 = vmatprep.subr.mxu0 0.0
      %498 = vmatpush2.msra.mxu0 0.0
      %499 = vmatprep.subr.mxu0 0.0
      %500 = vmatpush2.msra.mxu0 0.0
      %501 = vmatprep.subr.mxu0 0.0
      %502 = vmatpush2.msra.mxu0 0.0
      %503 = vmatprep.subr.mxu0 0.0
      %504 = vmatpush2.msra.mxu0 0.0
      %505 = vmatprep.subr.mxu0 0.0
      %506 = vmatpush2.msra.mxu0 0.0
      %507 = vmatprep.subr.mxu0 0.0
      %508 = vmatpush2.msra.mxu0 0.0
      %509 = vmatprep.subr.mxu0 0.0
      %510 = vmatpush2.msra.mxu0 0.0
      %511 = vmatprep.mubr.f32.mxu0 0.0
      %512 = vmatmul.mubr.f32.gmra.mxu0 %v444
      %v513 = vpop.f32.mrf.mxu0
      %v514 = vadd.f32 %v173, %v513
      %v515 = vpop.f32.mrf.mxu0
      %516 = vdwg.mxu0
      %v517 = vmul.f32 %v356, %v366
      %v518 = vadd.f32 %v517, %v514
      %v519 = vmul.f32 %v518, %v359
      %vm520 = vcmp.gt.f32.partialorder %v519, 1.0
      %v521 = vsel %vm520, 1, 0
      %v522 = vcvt.s32.f32 %v521
      %v523 = vmul.f32 %v364, %v522
      %v524 = vsub.f32 %v518, %v523
      %525 = vmatprep.subr.mxu0 0.0
      %526 = vmatpush1.msra.mxu0 %v160
      %527 = vmatprep.subr.mxu0 0.0
      %528 = vmatpush1.msra.mxu0 %v159
      %529 = vmatprep.subr.mxu0 0.0
      %530 = vmatpush1.msra.mxu0 %v158
      %531 = vmatprep.subr.mxu0 0.0
      %532 = vmatpush1.msra.mxu0 %v157
      %533 = vmatprep.subr.mxu0 0.0
      %534 = vmatpush1.msra.mxu0 %v156
      %535 = vmatprep.subr.mxu0 0.0
      %536 = vmatpush1.msra.mxu0 %v155
      %537 = vmatprep.subr.mxu0 0.0
      %538 = vmatpush1.msra.mxu0 %v154
      %539 = vmatprep.subr.mxu0 0.0
      %540 = vmatpush1.msra.mxu0 %v153
      %541 = vmatprep.subr.mxu0 0.0
      %542 = vmatpush1.msra.mxu0 %v152
      %543 = vmatprep.subr.mxu0 0.0
      %544 = vmatpush1.msra.mxu0 %v151
      %545 = vmatprep.subr.mxu0 0.0
      %546 = vmatpush1.msra.mxu0 %v150
      %547 = vmatprep.subr.mxu0 0.0
      %548 = vmatpush1.msra.mxu0 %v149
      %549 = vmatprep.subr.mxu0 0.0
      %550 = vmatpush1.msra.mxu0 %v148
      %551 = vmatprep.subr.mxu0 0.0
      %552 = vmatpush1.msra.mxu0 %v147
      %553 = vmatprep.subr.mxu0 0.0
      %554 = vmatpush1.msra.mxu0 %v146
      %555 = vmatprep.subr.mxu0 0.0
      %556 = vmatpush1.msra.mxu0 %v145
      %557 = vmatprep.subr.mxu0 0.0
      %558 = vmatpush2.msra.mxu0 0.0
      %559 = vmatprep.subr.mxu0 0.0
      %560 = vmatpush2.msra.mxu0 0.0
      %561 = vmatprep.subr.mxu0 0.0
      %562 = vmatpush2.msra.mxu0 0.0
      %563 = vmatprep.subr.mxu0 0.0
      %564 = vmatpush2.msra.mxu0 0.0
      %565 = vmatprep.subr.mxu0 0.0
      %566 = vmatpush2.msra.mxu0 0.0
      %567 = vmatprep.subr.mxu0 0.0
      %568 = vmatpush2.msra.mxu0 0.0
      %569 = vmatprep.subr.mxu0 0.0
      %570 = vmatpush2.msra.mxu0 0.0
      %571 = vmatprep.subr.mxu0 0.0
      %572 = vmatpush2.msra.mxu0 0.0
      %573 = vmatprep.subr.mxu0 0.0
      %574 = vmatpush2.msra.mxu0 0.0
      %575 = vmatprep.subr.mxu0 0.0
      %576 = vmatpush2.msra.mxu0 0.0
      %577 = vmatprep.subr.mxu0 0.0
      %578 = vmatpush2.msra.mxu0 0.0
      %579 = vmatprep.subr.mxu0 0.0
      %580 = vmatpush2.msra.mxu0 0.0
      %581 = vmatprep.subr.mxu0 0.0
      %582 = vmatpush2.msra.mxu0 0.0
      %583 = vmatprep.subr.mxu0 0.0
      %584 = vmatpush2.msra.mxu0 0.0
      %585 = vmatprep.subr.mxu0 0.0
      %586 = vmatpush2.msra.mxu0 0.0
      %587 = vmatprep.subr.mxu0 0.0
      %588 = vmatpush2.msra.mxu0 0.0
      %589 = vmatprep.mubr.f32.mxu0 0.0
      %590 = vmatmul.mubr.f32.gmra.mxu0 %v522
      %v591 = vpop.f32.mrf.mxu0
      %v592 = vadd.f32 0.0, %v591
      %v593 = vpop.f32.mrf.mxu0
      %594 = vdwg.mxu0
      %v595 = vadd.f32 %v438, %v592
      %v596 = vadd.f32 %v595, %v180
      %v597 = vmul.f32 %v275, %v446
      %v598 = vadd.f32 %v597, %v272
      %v599 = vmul.f32 %v598, %v278
      %vm600 = vcmp.gt.f32.partialorder %v599, 1.0
      %v601 = vsel %vm600, 1, 0
      %v602 = vcvt.s32.f32 %v601
      %v603 = vmul.f32 %v283, %v602
      %v604 = vsub.f32 %v598, %v603
      %605 = vmatprep.subr.mxu0 0.0
      %606 = vmatpush1.msra.mxu0 %v144
      %607 = vmatprep.subr.mxu0 0.0
      %608 = vmatpush1.msra.mxu0 %v143
      %609 = vmatprep.subr.mxu0 0.0
      %610 = vmatpush1.msra.mxu0 %v142
      %611 = vmatprep.subr.mxu0 0.0
      %612 = vmatpush1.msra.mxu0 %v141
      %613 = vmatprep.subr.mxu0 0.0
      %614 = vmatpush1.msra.mxu0 %v140
      %615 = vmatprep.subr.mxu0 0.0
      %616 = vmatpush1.msra.mxu0 %v139
      %617 = vmatprep.subr.mxu0 0.0
      %618 = vmatpush1.msra.mxu0 %v138
      %619 = vmatprep.subr.mxu0 0.0
      %620 = vmatpush1.msra.mxu0 %v137
      %621 = vmatprep.subr.mxu0 0.0
      %622 = vmatpush1.msra.mxu0 %v136
      %623 = vmatprep.subr.mxu0 0.0
      %624 = vmatpush1.msra.mxu0 %v135
      %625 = vmatprep.subr.mxu0 0.0
      %626 = vmatpush1.msra.mxu0 %v134
      %627 = vmatprep.subr.mxu0 0.0
      %628 = vmatpush1.msra.mxu0 %v133
      %629 = vmatprep.subr.mxu0 0.0
      %630 = vmatpush1.msra.mxu0 %v132
      %631 = vmatprep.subr.mxu0 0.0
      %632 = vmatpush1.msra.mxu0 %v131
      %633 = vmatprep.subr.mxu0 0.0
      %634 = vmatpush1.msra.mxu0 %v130
      %635 = vmatprep.subr.mxu0 0.0
      %636 = vmatpush1.msra.mxu0 %v129
      %637 = vmatprep.subr.mxu0 0.0
      %638 = vmatpush2.msra.mxu0 0.0
      %639 = vmatprep.subr.mxu0 0.0
      %640 = vmatpush2.msra.mxu0 0.0
      %641 = vmatprep.subr.mxu0 0.0
      %642 = vmatpush2.msra.mxu0 0.0
      %643 = vmatprep.subr.mxu0 0.0
      %644 = vmatpush2.msra.mxu0 0.0
      %645 = vmatprep.subr.mxu0 0.0
      %646 = vmatpush2.msra.mxu0 0.0
      %647 = vmatprep.subr.mxu0 0.0
      %648 = vmatpush2.msra.mxu0 0.0
      %649 = vmatprep.subr.mxu0 0.0
      %650 = vmatpush2.msra.mxu0 0.0
      %651 = vmatprep.subr.mxu0 0.0
      %652 = vmatpush2.msra.mxu0 0.0
      %653 = vmatprep.subr.mxu0 0.0
      %654 = vmatpush2.msra.mxu0 0.0
      %655 = vmatprep.subr.mxu0 0.0
      %656 = vmatpush2.msra.mxu0 0.0
      %657 = vmatprep.subr.mxu0 0.0
      %658 = vmatpush2.msra.mxu0 0.0
      %659 = vmatprep.subr.mxu0 0.0
      %660 = vmatpush2.msra.mxu0 0.0
      %661 = vmatprep.subr.mxu0 0.0
      %662 = vmatpush2.msra.mxu0 0.0
      %663 = vmatprep.subr.mxu0 0.0
      %664 = vmatpush2.msra.mxu0 0.0
      %665 = vmatprep.subr.mxu0 0.0
      %666 = vmatpush2.msra.mxu0 0.0
      %667 = vmatprep.subr.mxu0 0.0
      %668 = vmatpush2.msra.mxu0 0.0
      %669 = vmatprep.mubr.f32.mxu0 0.0
      %670 = vmatmul.mubr.f32.gmra.mxu0 %v602
      %v671 = vpop.f32.mrf.mxu0
      %v672 = vadd.f32 %v173, %v671
      %v673 = vpop.f32.mrf.mxu0
      %674 = vdwg.mxu0
      %v675 = vmul.f32 %v356, %v524
      %v676 = vadd.f32 %v675, %v672
      %v677 = vmul.f32 %v676, %v359
      %vm678 = vcmp.gt.f32.partialorder %v677, 1.0
      %v679 = vsel %vm678, 1, 0
      %v680 = vcvt.s32.f32 %v679
      %v681 = vmul.f32 %v364, %v680
      %v682 = vsub.f32 %v676, %v681
      %683 = vmatprep.subr.mxu0 0.0
      %684 = vmatpush1.msra.mxu0 %v160
      %685 = vmatprep.subr.mxu0 0.0
      %686 = vmatpush1.msra.mxu0 %v159
      %687 = vmatprep.subr.mxu0 0.0
      %688 = vmatpush1.msra.mxu0 %v158
      %689 = vmatprep.subr.mxu0 0.0
      %690 = vmatpush1.msra.mxu0 %v157
      %691 = vmatprep.subr.mxu0 0.0
      %692 = vmatpush1.msra.mxu0 %v156
      %693 = vmatprep.subr.mxu0 0.0
      %694 = vmatpush1.msra.mxu0 %v155
      %695 = vmatprep.subr.mxu0 0.0
      %696 = vmatpush1.msra.mxu0 %v154
      %697 = vmatprep.subr.mxu0 0.0
      %698 = vmatpush1.msra.mxu0 %v153
      %699 = vmatprep.subr.mxu0 0.0
      %700 = vmatpush1.msra.mxu0 %v152
      %701 = vmatprep.subr.mxu0 0.0
      %702 = vmatpush1.msra.mxu0 %v151
      %703 = vmatprep.subr.mxu0 0.0
      %704 = vmatpush1.msra.mxu0 %v150
      %705 = vmatprep.subr.mxu0 0.0
      %706 = vmatpush1.msra.mxu0 %v149
      %707 = vmatprep.subr.mxu0 0.0
      %708 = vmatpush1.msra.mxu0 %v148
      %709 = vmatprep.subr.mxu0 0.0
      %710 = vmatpush1.msra.mxu0 %v147
      %711 = vmatprep.subr.mxu0 0.0
      %712 = vmatpush1.msra.mxu0 %v146
      %713 = vmatprep.subr.mxu0 0.0
      %714 = vmatpush1.msra.mxu0 %v145
      %715 = vmatprep.subr.mxu0 0.0
      %716 = vmatpush2.msra.mxu0 0.0
      %717 = vmatprep.subr.mxu0 0.0
      %718 = vmatpush2.msra.mxu0 0.0
      %719 = vmatprep.subr.mxu0 0.0
      %720 = vmatpush2.msra.mxu0 0.0
      %721 = vmatprep.subr.mxu0 0.0
      %722 = vmatpush2.msra.mxu0 0.0
      %723 = vmatprep.subr.mxu0 0.0
      %724 = vmatpush2.msra.mxu0 0.0
      %725 = vmatprep.subr.mxu0 0.0
      %726 = vmatpush2.msra.mxu0 0.0
      %727 = vmatprep.subr.mxu0 0.0
      %728 = vmatpush2.msra.mxu0 0.0
      %729 = vmatprep.subr.mxu0 0.0
      %730 = vmatpush2.msra.mxu0 0.0
      %731 = vmatprep.subr.mxu0 0.0
      %732 = vmatpush2.msra.mxu0 0.0
      %733 = vmatprep.subr.mxu0 0.0
      %734 = vmatpush2.msra.mxu0 0.0
      %735 = vmatprep.subr.mxu0 0.0
      %736 = vmatpush2.msra.mxu0 0.0
      %737 = vmatprep.subr.mxu0 0.0
      %738 = vmatpush2.msra.mxu0 0.0
      %739 = vmatprep.subr.mxu0 0.0
      %740 = vmatpush2.msra.mxu0 0.0
      %741 = vmatprep.subr.mxu0 0.0
      %742 = vmatpush2.msra.mxu0 0.0
      %743 = vmatprep.subr.mxu0 0.0
      %744 = vmatpush2.msra.mxu0 0.0
      %745 = vmatprep.subr.mxu0 0.0
      %746 = vmatpush2.msra.mxu0 0.0
      %747 = vmatprep.mubr.f32.mxu0 0.0
      %748 = vmatmul.mubr.f32.gmra.mxu0 %v680
      %v749 = vpop.f32.mrf.mxu0
      %v750 = vadd.f32 0.0, %v749
      %v751 = vpop.f32.mrf.mxu0
      %752 = vdwg.mxu0
      %v753 = vadd.f32 %v596, %v750
      %v754 = vadd.f32 %v753, %v180
      %v755 = vmul.f32 %v275, %v604
      %v756 = vadd.f32 %v755, %v272
      %v757 = vmul.f32 %v756, %v278
      %vm758 = vcmp.gt.f32.partialorder %v757, 1.0
      %v759 = vsel %vm758, 1, 0
      %v760 = vcvt.s32.f32 %v759
      %v761 = vmul.f32 %v283, %v760
      %v762 = vsub.f32 %v756, %v761
      %763 = vmatprep.subr.mxu0 0.0
      %764 = vmatpush1.msra.mxu0 %v144
      %765 = vmatprep.subr.mxu0 0.0
      %766 = vmatpush1.msra.mxu0 %v143
      %767 = vmatprep.subr.mxu0 0.0
      %768 = vmatpush1.msra.mxu0 %v142
      %769 = vmatprep.subr.mxu0 0.0
      %770 = vmatpush1.msra.mxu0 %v141
      %771 = vmatprep.subr.mxu0 0.0
      %772 = vmatpush1.msra.mxu0 %v140
      %773 = vmatprep.subr.mxu0 0.0
      %774 = vmatpush1.msra.mxu0 %v139
      %775 = vmatprep.subr.mxu0 0.0
      %776 = vmatpush1.msra.mxu0 %v138
      %777 = vmatprep.subr.mxu0 0.0
      %778 = vmatpush1.msra.mxu0 %v137
      %779 = vmatprep.subr.mxu0 0.0
      %780 = vmatpush1.msra.mxu0 %v136
      %781 = vmatprep.subr.mxu0 0.0
      %782 = vmatpush1.msra.mxu0 %v135
      %783 = vmatprep.subr.mxu0 0.0
      %784 = vmatpush1.msra.mxu0 %v134
      %785 = vmatprep.subr.mxu0 0.0
      %786 = vmatpush1.msra.mxu0 %v133
      %787 = vmatprep.subr.mxu0 0.0
      %788 = vmatpush1.msra.mxu0 %v132
      %789 = vmatprep.subr.mxu0 0.0
      %790 = vmatpush1.msra.mxu0 %v131
      %791 = vmatprep.subr.mxu0 0.0
      %792 = vmatpush1.msra.mxu0 %v130
      %793 = vmatprep.subr.mxu0 0.0
      %794 = vmatpush1.msra.mxu0 %v129
      %795 = vmatprep.subr.mxu0 0.0
      %796 = vmatpush2.msra.mxu0 0.0
      %797 = vmatprep.subr.mxu0 0.0
      %798 = vmatpush2.msra.mxu0 0.0
      %799 = vmatprep.subr.mxu0 0.0
      %800 = vmatpush2.msra.mxu0 0.0
      %801 = vmatprep.subr.mxu0 0.0
      %802 = vmatpush2.msra.mxu0 0.0
      %803 = vmatprep.subr.mxu0 0.0
      %804 = vmatpush2.msra.mxu0 0.0
      %805 = vmatprep.subr.mxu0 0.0
      %806 = vmatpush2.msra.mxu0 0.0
      %807 = vmatprep.subr.mxu0 0.0
      %808 = vmatpush2.msra.mxu0 0.0
      %809 = vmatprep.subr.mxu0 0.0
      %810 = vmatpush2.msra.mxu0 0.0
      %811 = vmatprep.subr.mxu0 0.0
      %812 = vmatpush2.msra.mxu0 0.0
      %813 = vmatprep.subr.mxu0 0.0
      %814 = vmatpush2.msra.mxu0 0.0
      %815 = vmatprep.subr.mxu0 0.0
      %816 = vmatpush2.msra.mxu0 0.0
      %817 = vmatprep.subr.mxu0 0.0
      %818 = vmatpush2.msra.mxu0 0.0
      %819 = vmatprep.subr.mxu0 0.0
      %820 = vmatpush2.msra.mxu0 0.0
      %821 = vmatprep.subr.mxu0 0.0
      %822 = vmatpush2.msra.mxu0 0.0
      %823 = vmatprep.subr.mxu0 0.0
      %824 = vmatpush2.msra.mxu0 0.0
      %825 = vmatprep.subr.mxu0 0.0
      %826 = vmatpush2.msra.mxu0 0.0
      %827 = vmatprep.mubr.f32.mxu0 0.0
      %828 = vmatmul.mubr.f32.gmra.mxu0 %v760
      %v829 = vpop.f32.mrf.mxu0
      %v830 = vadd.f32 %v173, %v829
      %v831 = vpop.f32.mrf.mxu0
      %832 = vdwg.mxu0
      %v833 = vmul.f32 %v356, %v682
      %v834 = vadd.f32 %v833, %v830
      %v835 = vmul.f32 %v834, %v359
      %vm836 = vcmp.gt.f32.partialorder %v835, 1.0
      %v837 = vsel %vm836, 1, 0
      %v838 = vcvt.s32.f32 %v837
      %v839 = vmul.f32 %v364, %v838
      %v840 = vsub.f32 %v834, %v839
      %841 = vmatprep.subr.mxu0 0.0
      %842 = vmatpush1.msra.mxu0 %v160
      %843 = vmatprep.subr.mxu0 0.0
      %844 = vmatpush1.msra.mxu0 %v159
      %845 = vmatprep.subr.mxu0 0.0
      %846 = vmatpush1.msra.mxu0 %v158
      %847 = vmatprep.subr.mxu0 0.0
      %848 = vmatpush1.msra.mxu0 %v157
      %849 = vmatprep.subr.mxu0 0.0
      %850 = vmatpush1.msra.mxu0 %v156
      %851 = vmatprep.subr.mxu0 0.0
      %852 = vmatpush1.msra.mxu0 %v155
      %853 = vmatprep.subr.mxu0 0.0
      %854 = vmatpush1.msra.mxu0 %v154
      %855 = vmatprep.subr.mxu0 0.0
      %856 = vmatpush1.msra.mxu0 %v153
      %857 = vmatprep.subr.mxu0 0.0
      %858 = vmatpush1.msra.mxu0 %v152
      %859 = vmatprep.subr.mxu0 0.0
      %860 = vmatpush1.msra.mxu0 %v151
      %861 = vmatprep.subr.mxu0 0.0
      %862 = vmatpush1.msra.mxu0 %v150
      %863 = vmatprep.subr.mxu0 0.0
      %864 = vmatpush1.msra.mxu0 %v149
      %865 = vmatprep.subr.mxu0 0.0
      %866 = vmatpush1.msra.mxu0 %v148
      %867 = vmatprep.subr.mxu0 0.0
      %868 = vmatpush1.msra.mxu0 %v147
      %869 = vmatprep.subr.mxu0 0.0
      %870 = vmatpush1.msra.mxu0 %v146
      %871 = vmatprep.subr.mxu0 0.0
      %872 = vmatpush1.msra.mxu0 %v145
      %873 = vmatprep.subr.mxu0 0.0
      %874 = vmatpush2.msra.mxu0 0.0
      %875 = vmatprep.subr.mxu0 0.0
      %876 = vmatpush2.msra.mxu0 0.0
      %877 = vmatprep.subr.mxu0 0.0
      %878 = vmatpush2.msra.mxu0 0.0
      %879 = vmatprep.subr.mxu0 0.0
      %880 = vmatpush2.msra.mxu0 0.0
      %881 = vmatprep.subr.mxu0 0.0
      %882 = vmatpush2.msra.mxu0 0.0
      %883 = vmatprep.subr.mxu0 0.0
      %884 = vmatpush2.msra.mxu0 0.0
      %885 = vmatprep.subr.mxu0 0.0
      %886 = vmatpush2.msra.mxu0 0.0
      %887 = vmatprep.subr.mxu0 0.0
      %888 = vmatpush2.msra.mxu0 0.0
      %889 = vmatprep.subr.mxu0 0.0
      %890 = vmatpush2.msra.mxu0 0.0
      %891 = vmatprep.subr.mxu0 0.0
      %892 = vmatpush2.msra.mxu0 0.0
      %893 = vmatprep.subr.mxu0 0.0
      %894 = vmatpush2.msra.mxu0 0.0
      %895 = vmatprep.subr.mxu0 0.0
      %896 = vmatpush2.msra.mxu0 0.0
      %897 = vmatprep.subr.mxu0 0.0
      %898 = vmatpush2.msra.mxu0 0.0
      %899 = vmatprep.subr.mxu0 0.0
      %900 = vmatpush2.msra.mxu0 0.0
      %901 = vmatprep.subr.mxu0 0.0
      %902 = vmatpush2.msra.mxu0 0.0
      %903 = vmatprep.subr.mxu0 0.0
      %904 = vmatpush2.msra.mxu0 0.0
      %905 = vmatprep.mubr.f32.mxu0 0.0
      %906 = vmatmul.mubr.f32.gmra.mxu0 %v838
      %v907 = vpop.f32.mrf.mxu0
      %v908 = vadd.f32 0.0, %v907
      %v909 = vpop.f32.mrf.mxu0
      %910 = vdwg.mxu0
      %v911 = vadd.f32 %v754, %v908
      %v912 = vadd.f32 %v911, %v180
      %v913 = vmul.f32 %v275, %v762
      %v914 = vadd.f32 %v913, %v272
      %v915 = vmul.f32 %v914, %v278
      %vm916 = vcmp.gt.f32.partialorder %v915, 1.0
      %v917 = vsel %vm916, 1, 0
      %v918 = vcvt.s32.f32 %v917
      %v919 = vmul.f32 %v283, %v918
      %v920 = vsub.f32 %v914, %v919
      %921 = vmatprep.subr.mxu0 0.0
      %922 = vmatpush1.msra.mxu0 %v144
      %923 = vmatprep.subr.mxu0 0.0
      %924 = vmatpush1.msra.mxu0 %v143
      %925 = vmatprep.subr.mxu0 0.0
      %926 = vmatpush1.msra.mxu0 %v142
      %927 = vmatprep.subr.mxu0 0.0
      %928 = vmatpush1.msra.mxu0 %v141
      %929 = vmatprep.subr.mxu0 0.0
      %930 = vmatpush1.msra.mxu0 %v140
      %931 = vmatprep.subr.mxu0 0.0
      %932 = vmatpush1.msra.mxu0 %v139
      %933 = vmatprep.subr.mxu0 0.0
      %934 = vmatpush1.msra.mxu0 %v138
      %935 = vmatprep.subr.mxu0 0.0
      %936 = vmatpush1.msra.mxu0 %v137
      %937 = vmatprep.subr.mxu0 0.0
      %938 = vmatpush1.msra.mxu0 %v136
      %939 = vmatprep.subr.mxu0 0.0
      %940 = vmatpush1.msra.mxu0 %v135
      %941 = vmatprep.subr.mxu0 0.0
      %942 = vmatpush1.msra.mxu0 %v134
      %943 = vmatprep.subr.mxu0 0.0
      %944 = vmatpush1.msra.mxu0 %v133
      %945 = vmatprep.subr.mxu0 0.0
      %946 = vmatpush1.msra.mxu0 %v132
      %947 = vmatprep.subr.mxu0 0.0
      %948 = vmatpush1.msra.mxu0 %v131
      %949 = vmatprep.subr.mxu0 0.0
      %950 = vmatpush1.msra.mxu0 %v130
      %951 = vmatprep.subr.mxu0 0.0
      %952 = vmatpush1.msra.mxu0 %v129
      %953 = vmatprep.subr.mxu0 0.0
      %954 = vmatpush2.msra.mxu0 0.0
      %955 = vmatprep.subr.mxu0 0.0
      %956 = vmatpush2.msra.mxu0 0.0
      %957 = vmatprep.subr.mxu0 0.0
      %958 = vmatpush2.msra.mxu0 0.0
      %959 = vmatprep.subr.mxu0 0.0
      %960 = vmatpush2.msra.mxu0 0.0
      %961 = vmatprep.subr.mxu0 0.0
      %962 = vmatpush2.msra.mxu0 0.0
      %963 = vmatprep.subr.mxu0 0.0
      %964 = vmatpush2.msra.mxu0 0.0
      %965 = vmatprep.subr.mxu0 0.0
      %966 = vmatpush2.msra.mxu0 0.0
      %967 = vmatprep.subr.mxu0 0.0
      %968 = vmatpush2.msra.mxu0 0.0
      %969 = vmatprep.subr.mxu0 0.0
      %970 = vmatpush2.msra.mxu0 0.0
      %971 = vmatprep.subr.mxu0 0.0
      %972 = vmatpush2.msra.mxu0 0.0
      %973 = vmatprep.subr.mxu0 0.0
      %974 = vmatpush2.msra.mxu0 0.0
      %975 = vmatprep.subr.mxu0 0.0
      %976 = vmatpush2.msra.mxu0 0.0
      %977 = vmatprep.subr.mxu0 0.0
      %978 = vmatpush2.msra.mxu0 0.0
      %979 = vmatprep.subr.mxu0 0.0
      %980 = vmatpush2.msra.mxu0 0.0
      %981 = vmatprep.subr.mxu0 0.0
      %982 = vmatpush2.msra.mxu0 0.0
      %983 = vmatprep.subr.mxu0 0.0
      %984 = vmatpush2.msra.mxu0 0.0
      %985 = vmatprep.mubr.f32.mxu0 0.0
      %986 = vmatmul.mubr.f32.gmra.mxu0 %v918
      %v987 = vpop.f32.mrf.mxu0
      %v988 = vadd.f32 %v173, %v987
      %v989 = vpop.f32.mrf.mxu0
      %990 = vdwg.mxu0
      %v991 = vmul.f32 %v356, %v840
      %v992 = vadd.f32 %v991, %v988
      %v993 = vmul.f32 %v992, %v359
      %vm994 = vcmp.gt.f32.partialorder %v993, 1.0
      %v995 = vsel %vm994, 1, 0
      %v996 = vcvt.s32.f32 %v995
      %v997 = vmul.f32 %v364, %v996
      %v998 = vsub.f32 %v992, %v997
      %999 = vmatprep.subr.mxu0 0.0
      %1000 = vmatpush1.msra.mxu0 %v160
      %1001 = vmatprep.subr.mxu0 0.0
      %1002 = vmatpush1.msra.mxu0 %v159
      %1003 = vmatprep.subr.mxu0 0.0
      %1004 = vmatpush1.msra.mxu0 %v158
      %1005 = vmatprep.subr.mxu0 0.0
      %1006 = vmatpush1.msra.mxu0 %v157
      %1007 = vmatprep.subr.mxu0 0.0
      %1008 = vmatpush1.msra.mxu0 %v156
      %1009 = vmatprep.subr.mxu0 0.0
      %1010 = vmatpush1.msra.mxu0 %v155
      %1011 = vmatprep.subr.mxu0 0.0
      %1012 = vmatpush1.msra.mxu0 %v154
      %1013 = vmatprep.subr.mxu0 0.0
      %1014 = vmatpush1.msra.mxu0 %v153
      %1015 = vmatprep.subr.mxu0 0.0
      %1016 = vmatpush1.msra.mxu0 %v152
      %1017 = vmatprep.subr.mxu0 0.0
      %1018 = vmatpush1.msra.mxu0 %v151
      %1019 = vmatprep.subr.mxu0 0.0
      %1020 = vmatpush1.msra.mxu0 %v150
      %1021 = vmatprep.subr.mxu0 0.0
      %1022 = vmatpush1.msra.mxu0 %v149
      %1023 = vmatprep.subr.mxu0 0.0
      %1024 = vmatpush1.msra.mxu0 %v148
      %1025 = vmatprep.subr.mxu0 0.0
      %1026 = vmatpush1.msra.mxu0 %v147
      %1027 = vmatprep.subr.mxu0 0.0
      %1028 = vmatpush1.msra.mxu0 %v146
      %1029 = vmatprep.subr.mxu0 0.0
      %1030 = vmatpush1.msra.mxu0 %v145
      %1031 = vmatprep.subr.mxu0 0.0
      %1032 = vmatpush2.msra.mxu0 0.0
      %1033 = vmatprep.subr.mxu0 0.0
      %1034 = vmatpush2.msra.mxu0 0.0
      %1035 = vmatprep.subr.mxu0 0.0
      %1036 = vmatpush2.msra.mxu0 0.0
      %1037 = vmatprep.subr.mxu0 0.0
      %1038 = vmatpush2.msra.mxu0 0.0
      %1039 = vmatprep.subr.mxu0 0.0
      %1040 = vmatpush2.msra.mxu0 0.0
      %1041 = vmatprep.subr.mxu0 0.0
      %1042 = vmatpush2.msra.mxu0 0.0
      %1043 = vmatprep.subr.mxu0 0.0
      %1044 = vmatpush2.msra.mxu0 0.0
      %1045 = vmatprep.subr.mxu0 0.0
      %1046 = vmatpush2.msra.mxu0 0.0
      %1047 = vmatprep.subr.mxu0 0.0
      %1048 = vmatpush2.msra.mxu0 0.0
      %1049 = vmatprep.subr.mxu0 0.0
      %1050 = vmatpush2.msra.mxu0 0.0
      %1051 = vmatprep.subr.mxu0 0.0
      %1052 = vmatpush2.msra.mxu0 0.0
      %1053 = vmatprep.subr.mxu0 0.0
      %1054 = vmatpush2.msra.mxu0 0.0
      %1055 = vmatprep.subr.mxu0 0.0
      %1056 = vmatpush2.msra.mxu0 0.0
      %1057 = vmatprep.subr.mxu0 0.0
      %1058 = vmatpush2.msra.mxu0 0.0
      %1059 = vmatprep.subr.mxu0 0.0
      %1060 = vmatpush2.msra.mxu0 0.0
      %1061 = vmatprep.subr.mxu0 0.0
      %1062 = vmatpush2.msra.mxu0 0.0
      %1063 = vmatprep.mubr.f32.mxu0 0.0
      %1064 = vmatmul.mubr.f32.gmra.mxu0 %v996
      %v1065 = vpop.f32.mrf.mxu0
      %v1066 = vadd.f32 0.0, %v1065
      %v1067 = vpop.f32.mrf.mxu0
      %1068 = vdwg.mxu0
      %v1069 = vadd.f32 %v912, %v1066
      %v1070 = vadd.f32 %v1069, %v180
      %v1071 = vmul.f32 %v275, %v920
      %v1072 = vadd.f32 %v1071, %v272
      %v1073 = vmul.f32 %v1072, %v278
      %vm1074 = vcmp.gt.f32.partialorder %v1073, 1.0
      %v1075 = vsel %vm1074, 1, 0
      %v1076 = vcvt.s32.f32 %v1075
      %v1077 = vmul.f32 %v283, %v1076
      %v1078 = vsub.f32 %v1072, %v1077
      %1079 = vmatprep.subr.mxu0 0.0
      %1080 = vmatpush1.msra.mxu0 %v144
      %1081 = vmatprep.subr.mxu0 0.0
      %1082 = vmatpush1.msra.mxu0 %v143
      %1083 = vmatprep.subr.mxu0 0.0
      %1084 = vmatpush1.msra.mxu0 %v142
      %1085 = vmatprep.subr.mxu0 0.0
      %1086 = vmatpush1.msra.mxu0 %v141
      %1087 = vmatprep.subr.mxu0 0.0
      %1088 = vmatpush1.msra.mxu0 %v140
      %1089 = vmatprep.subr.mxu0 0.0
      %1090 = vmatpush1.msra.mxu0 %v139
      %1091 = vmatprep.subr.mxu0 0.0
      %1092 = vmatpush1.msra.mxu0 %v138
      %1093 = vmatprep.subr.mxu0 0.0
      %1094 = vmatpush1.msra.mxu0 %v137
      %1095 = vmatprep.subr.mxu0 0.0
      %1096 = vmatpush1.msra.mxu0 %v136
      %1097 = vmatprep.subr.mxu0 0.0
      %1098 = vmatpush1.msra.mxu0 %v135
      %1099 = vmatprep.subr.mxu0 0.0
      %1100 = vmatpush1.msra.mxu0 %v134
      %1101 = vmatprep.subr.mxu0 0.0
      %1102 = vmatpush1.msra.mxu0 %v133
      %1103 = vmatprep.subr.mxu0 0.0
      %1104 = vmatpush1.msra.mxu0 %v132
      %1105 = vmatprep.subr.mxu0 0.0
      %1106 = vmatpush1.msra.mxu0 %v131
      %1107 = vmatprep.subr.mxu0 0.0
      %1108 = vmatpush1.msra.mxu0 %v130
      %1109 = vmatprep.subr.mxu0 0.0
      %1110 = vmatpush1.msra.mxu0 %v129
      %1111 = vmatprep.subr.mxu0 0.0
      %1112 = vmatpush2.msra.mxu0 0.0
      %1113 = vmatprep.subr.mxu0 0.0
      %1114 = vmatpush2.msra.mxu0 0.0
      %1115 = vmatprep.subr.mxu0 0.0
      %1116 = vmatpush2.msra.mxu0 0.0
      %1117 = vmatprep.subr.mxu0 0.0
      %1118 = vmatpush2.msra.mxu0 0.0
      %1119 = vmatprep.subr.mxu0 0.0
      %1120 = vmatpush2.msra.mxu0 0.0
      %1121 = vmatprep.subr.mxu0 0.0
      %1122 = vmatpush2.msra.mxu0 0.0
      %1123 = vmatprep.subr.mxu0 0.0
      %1124 = vmatpush2.msra.mxu0 0.0
      %1125 = vmatprep.subr.mxu0 0.0
      %1126 = vmatpush2.msra.mxu0 0.0
      %1127 = vmatprep.subr.mxu0 0.0
      %1128 = vmatpush2.msra.mxu0 0.0
      %1129 = vmatprep.subr.mxu0 0.0
      %1130 = vmatpush2.msra.mxu0 0.0
      %1131 = vmatprep.subr.mxu0 0.0
      %1132 = vmatpush2.msra.mxu0 0.0
      %1133 = vmatprep.subr.mxu0 0.0
      %1134 = vmatpush2.msra.mxu0 0.0
      %1135 = vmatprep.subr.mxu0 0.0
      %1136 = vmatpush2.msra.mxu0 0.0
      %1137 = vmatprep.subr.mxu0 0.0
      %1138 = vmatpush2.msra.mxu0 0.0
      %1139 = vmatprep.subr.mxu0 0.0
      %1140 = vmatpush2.msra.mxu0 0.0
      %1141 = vmatprep.subr.mxu0 0.0
      %1142 = vmatpush2.msra.mxu0 0.0
      %1143 = vmatprep.mubr.f32.mxu0 0.0
      %1144 = vmatmul.mubr.f32.gmra.mxu0 %v1076
      %v1145 = vpop.f32.mrf.mxu0
      %v1146 = vadd.f32 %v173, %v1145
      %v1147 = vpop.f32.mrf.mxu0
      %1148 = vdwg.mxu0
      %v1149 = vmul.f32 %v356, %v998
      %v1150 = vadd.f32 %v1149, %v1146
      %v1151 = vmul.f32 %v1150, %v359
      %vm1152 = vcmp.gt.f32.partialorder %v1151, 1.0
      %v1153 = vsel %vm1152, 1, 0
      %v1154 = vcvt.s32.f32 %v1153
      %v1155 = vmul.f32 %v364, %v1154
      %v1156 = vsub.f32 %v1150, %v1155
      %1157 = vmatprep.subr.mxu0 0.0
      %1158 = vmatpush1.msra.mxu0 %v160
      %1159 = vmatprep.subr.mxu0 0.0
      %1160 = vmatpush1.msra.mxu0 %v159
      %1161 = vmatprep.subr.mxu0 0.0
      %1162 = vmatpush1.msra.mxu0 %v158
      %1163 = vmatprep.subr.mxu0 0.0
      %1164 = vmatpush1.msra.mxu0 %v157
      %1165 = vmatprep.subr.mxu0 0.0
      %1166 = vmatpush1.msra.mxu0 %v156
      %1167 = vmatprep.subr.mxu0 0.0
      %1168 = vmatpush1.msra.mxu0 %v155
      %1169 = vmatprep.subr.mxu0 0.0
      %1170 = vmatpush1.msra.mxu0 %v154
      %1171 = vmatprep.subr.mxu0 0.0
      %1172 = vmatpush1.msra.mxu0 %v153
      %1173 = vmatprep.subr.mxu0 0.0
      %1174 = vmatpush1.msra.mxu0 %v152
      %1175 = vmatprep.subr.mxu0 0.0
      %1176 = vmatpush1.msra.mxu0 %v151
      %1177 = vmatprep.subr.mxu0 0.0
      %1178 = vmatpush1.msra.mxu0 %v150
      %1179 = vmatprep.subr.mxu0 0.0
      %1180 = vmatpush1.msra.mxu0 %v149
      %1181 = vmatprep.subr.mxu0 0.0
      %1182 = vmatpush1.msra.mxu0 %v148
      %1183 = vmatprep.subr.mxu0 0.0
      %1184 = vmatpush1.msra.mxu0 %v147
      %1185 = vmatprep.subr.mxu0 0.0
      %1186 = vmatpush1.msra.mxu0 %v146
      %1187 = vmatprep.subr.mxu0 0.0
      %1188 = vmatpush1.msra.mxu0 %v145
      %1189 = vmatprep.subr.mxu0 0.0
      %1190 = vmatpush2.msra.mxu0 0.0
      %1191 = vmatprep.subr.mxu0 0.0
      %1192 = vmatpush2.msra.mxu0 0.0
      %1193 = vmatprep.subr.mxu0 0.0
      %1194 = vmatpush2.msra.mxu0 0.0
      %1195 = vmatprep.subr.mxu0 0.0
      %1196 = vmatpush2.msra.mxu0 0.0
      %1197 = vmatprep.subr.mxu0 0.0
      %1198 = vmatpush2.msra.mxu0 0.0
      %1199 = vmatprep.subr.mxu0 0.0
      %1200 = vmatpush2.msra.mxu0 0.0
      %1201 = vmatprep.subr.mxu0 0.0
      %1202 = vmatpush2.msra.mxu0 0.0
      %1203 = vmatprep.subr.mxu0 0.0
      %1204 = vmatpush2.msra.mxu0 0.0
      %1205 = vmatprep.subr.mxu0 0.0
      %1206 = vmatpush2.msra.mxu0 0.0
      %1207 = vmatprep.subr.mxu0 0.0
      %1208 = vmatpush2.msra.mxu0 0.0
      %1209 = vmatprep.subr.mxu0 0.0
      %1210 = vmatpush2.msra.mxu0 0.0
      %1211 = vmatprep.subr.mxu0 0.0
      %1212 = vmatpush2.msra.mxu0 0.0
      %1213 = vmatprep.subr.mxu0 0.0
      %1214 = vmatpush2.msra.mxu0 0.0
      %1215 = vmatprep.subr.mxu0 0.0
      %1216 = vmatpush2.msra.mxu0 0.0
      %1217 = vmatprep.subr.mxu0 0.0
      %1218 = vmatpush2.msra.mxu0 0.0
      %1219 = vmatprep.subr.mxu0 0.0
      %1220 = vmatpush2.msra.mxu0 0.0
      %1221 = vmatprep.mubr.f32.mxu0 0.0
      %1222 = vmatmul.mubr.f32.gmra.mxu0 %v1154
      %v1223 = vpop.f32.mrf.mxu0
      %v1224 = vadd.f32 0.0, %v1223
      %v1225 = vpop.f32.mrf.mxu0
      %1226 = vdwg.mxu0
      %v1227 = vadd.f32 %v1070, %v1224
      %v1228 = vadd.f32 %v1227, %v180
      %v1229 = vmul.f32 %v275, %v1078
      %v1230 = vadd.f32 %v1229, %v272
      %v1231 = vmul.f32 %v1230, %v278
      %vm1232 = vcmp.gt.f32.partialorder %v1231, 1.0
      %v1233 = vsel %vm1232, 1, 0
      %v1234 = vcvt.s32.f32 %v1233
      %v1235 = vmul.f32 %v283, %v1234
      %v1236 = vsub.f32 %v1230, %v1235
      %1237 = vmatprep.subr.mxu0 0.0
      %1238 = vmatpush1.msra.mxu0 %v144
      %1239 = vmatprep.subr.mxu0 0.0
      %1240 = vmatpush1.msra.mxu0 %v143
      %1241 = vmatprep.subr.mxu0 0.0
      %1242 = vmatpush1.msra.mxu0 %v142
      %1243 = vmatprep.subr.mxu0 0.0
      %1244 = vmatpush1.msra.mxu0 %v141
      %1245 = vmatprep.subr.mxu0 0.0
      %1246 = vmatpush1.msra.mxu0 %v140
      %1247 = vmatprep.subr.mxu0 0.0
      %1248 = vmatpush1.msra.mxu0 %v139
      %1249 = vmatprep.subr.mxu0 0.0
      %1250 = vmatpush1.msra.mxu0 %v138
      %1251 = vmatprep.subr.mxu0 0.0
      %1252 = vmatpush1.msra.mxu0 %v137
      %1253 = vmatprep.subr.mxu0 0.0
      %1254 = vmatpush1.msra.mxu0 %v136
      %1255 = vmatprep.subr.mxu0 0.0
      %1256 = vmatpush1.msra.mxu0 %v135
      %1257 = vmatprep.subr.mxu0 0.0
      %1258 = vmatpush1.msra.mxu0 %v134
      %1259 = vmatprep.subr.mxu0 0.0
      %1260 = vmatpush1.msra.mxu0 %v133
      %1261 = vmatprep.subr.mxu0 0.0
      %1262 = vmatpush1.msra.mxu0 %v132
      %1263 = vmatprep.subr.mxu0 0.0
      %1264 = vmatpush1.msra.mxu0 %v131
      %1265 = vmatprep.subr.mxu0 0.0
      %1266 = vmatpush1.msra.mxu0 %v130
      %1267 = vmatprep.subr.mxu0 0.0
      %1268 = vmatpush1.msra.mxu0 %v129
      %1269 = vmatprep.subr.mxu0 0.0
      %1270 = vmatpush2.msra.mxu0 0.0
      %1271 = vmatprep.subr.mxu0 0.0
      %1272 = vmatpush2.msra.mxu0 0.0
      %1273 = vmatprep.subr.mxu0 0.0
      %1274 = vmatpush2.msra.mxu0 0.0
      %1275 = vmatprep.subr.mxu0 0.0
      %1276 = vmatpush2.msra.mxu0 0.0
      %1277 = vmatprep.subr.mxu0 0.0
      %1278 = vmatpush2.msra.mxu0 0.0
      %1279 = vmatprep.subr.mxu0 0.0
      %1280 = vmatpush2.msra.mxu0 0.0
      %1281 = vmatprep.subr.mxu0 0.0
      %1282 = vmatpush2.msra.mxu0 0.0
      %1283 = vmatprep.subr.mxu0 0.0
      %1284 = vmatpush2.msra.mxu0 0.0
      %1285 = vmatprep.subr.mxu0 0.0
      %1286 = vmatpush2.msra.mxu0 0.0
      %1287 = vmatprep.subr.mxu0 0.0
      %1288 = vmatpush2.msra.mxu0 0.0
      %1289 = vmatprep.subr.mxu0 0.0
      %1290 = vmatpush2.msra.mxu0 0.0
      %1291 = vmatprep.subr.mxu0 0.0
      %1292 = vmatpush2.msra.mxu0 0.0
      %1293 = vmatprep.subr.mxu0 0.0
      %1294 = vmatpush2.msra.mxu0 0.0
      %1295 = vmatprep.subr.mxu0 0.0
      %1296 = vmatpush2.msra.mxu0 0.0
      %1297 = vmatprep.subr.mxu0 0.0
      %1298 = vmatpush2.msra.mxu0 0.0
      %1299 = vmatprep.subr.mxu0 0.0
      %1300 = vmatpush2.msra.mxu0 0.0
      %1301 = vmatprep.mubr.f32.mxu0 0.0
      %1302 = vmatmul.mubr.f32.gmra.mxu0 %v1234
      %v1303 = vpop.f32.mrf.mxu0
      %v1304 = vadd.f32 %v173, %v1303
      %v1305 = vpop.f32.mrf.mxu0
      %1306 = vdwg.mxu0
      %v1307 = vmul.f32 %v356, %v1156
      %v1308 = vadd.f32 %v1307, %v1304
      %v1309 = vmul.f32 %v1308, %v359
      %vm1310 = vcmp.gt.f32.partialorder %v1309, 1.0
      %v1311 = vsel %vm1310, 1, 0
      %v1312 = vcvt.s32.f32 %v1311
      %v1313 = vmul.f32 %v364, %v1312
      %v1314 = vsub.f32 %v1308, %v1313
      %1315 = vmatprep.subr.mxu0 0.0
      %1316 = vmatpush1.msra.mxu0 %v160
      %1317 = vmatprep.subr.mxu0 0.0
      %1318 = vmatpush1.msra.mxu0 %v159
      %1319 = vmatprep.subr.mxu0 0.0
      %1320 = vmatpush1.msra.mxu0 %v158
      %1321 = vmatprep.subr.mxu0 0.0
      %1322 = vmatpush1.msra.mxu0 %v157
      %1323 = vmatprep.subr.mxu0 0.0
      %1324 = vmatpush1.msra.mxu0 %v156
      %1325 = vmatprep.subr.mxu0 0.0
      %1326 = vmatpush1.msra.mxu0 %v155
      %1327 = vmatprep.subr.mxu0 0.0
      %1328 = vmatpush1.msra.mxu0 %v154
      %1329 = vmatprep.subr.mxu0 0.0
      %1330 = vmatpush1.msra.mxu0 %v153
      %1331 = vmatprep.subr.mxu0 0.0
      %1332 = vmatpush1.msra.mxu0 %v152
      %1333 = vmatprep.subr.mxu0 0.0
      %1334 = vmatpush1.msra.mxu0 %v151
      %1335 = vmatprep.subr.mxu0 0.0
      %1336 = vmatpush1.msra.mxu0 %v150
      %1337 = vmatprep.subr.mxu0 0.0
      %1338 = vmatpush1.msra.mxu0 %v149
      %1339 = vmatprep.subr.mxu0 0.0
      %1340 = vmatpush1.msra.mxu0 %v148
      %1341 = vmatprep.subr.mxu0 0.0
      %1342 = vmatpush1.msra.mxu0 %v147
      %1343 = vmatprep.subr.mxu0 0.0
      %1344 = vmatpush1.msra.mxu0 %v146
      %1345 = vmatprep.subr.mxu0 0.0
      %1346 = vmatpush1.msra.mxu0 %v145
      %1347 = vmatprep.subr.mxu0 0.0
      %1348 = vmatpush2.msra.mxu0 0.0
      %1349 = vmatprep.subr.mxu0 0.0
      %1350 = vmatpush2.msra.mxu0 0.0
      %1351 = vmatprep.subr.mxu0 0.0
      %1352 = vmatpush2.msra.mxu0 0.0
      %1353 = vmatprep.subr.mxu0 0.0
      %1354 = vmatpush2.msra.mxu0 0.0
      %1355 = vmatprep.subr.mxu0 0.0
      %1356 = vmatpush2.msra.mxu0 0.0
      %1357 = vmatprep.subr.mxu0 0.0
      %1358 = vmatpush2.msra.mxu0 0.0
      %1359 = vmatprep.subr.mxu0 0.0
      %1360 = vmatpush2.msra.mxu0 0.0
      %1361 = vmatprep.subr.mxu0 0.0
      %1362 = vmatpush2.msra.mxu0 0.0
      %1363 = vmatprep.subr.mxu0 0.0
      %1364 = vmatpush2.msra.mxu0 0.0
      %1365 = vmatprep.subr.mxu0 0.0
      %1366 = vmatpush2.msra.mxu0 0.0
      %1367 = vmatprep.subr.mxu0 0.0
      %1368 = vmatpush2.msra.mxu0 0.0
      %1369 = vmatprep.subr.mxu0 0.0
      %1370 = vmatpush2.msra.mxu0 0.0
      %1371 = vmatprep.subr.mxu0 0.0
      %1372 = vmatpush2.msra.mxu0 0.0
      %1373 = vmatprep.subr.mxu0 0.0
      %1374 = vmatpush2.msra.mxu0 0.0
      %1375 = vmatprep.subr.mxu0 0.0
      %1376 = vmatpush2.msra.mxu0 0.0
      %1377 = vmatprep.subr.mxu0 0.0
      %1378 = vmatpush2.msra.mxu0 0.0
      %1379 = vmatprep.mubr.f32.mxu0 0.0
      %1380 = vmatmul.mubr.f32.gmra.mxu0 %v1312
      %v1381 = vpop.f32.mrf.mxu0
      %v1382 = vadd.f32 0.0, %v1381
      %v1383 = vpop.f32.mrf.mxu0
      %1384 = vdwg.mxu0
      %v1385 = vadd.f32 %v1228, %v1382
      %v1386 = vadd.f32 %v1385, %v180
      %v1387 = vmul.f32 %v275, %v1236
      %v1388 = vadd.f32 %v1387, %v272
      %v1389 = vmul.f32 %v1388, %v278
      %vm1390 = vcmp.gt.f32.partialorder %v1389, 1.0
      %v1391 = vsel %vm1390, 1, 0
      %v1392 = vcvt.s32.f32 %v1391
      %v1393 = vmul.f32 %v283, %v1392
      %v1394 = vsub.f32 %v1388, %v1393
      %1395 = vmatprep.subr.mxu0 0.0
      %1396 = vmatpush1.msra.mxu0 %v144
      %1397 = vmatprep.subr.mxu0 0.0
      %1398 = vmatpush1.msra.mxu0 %v143
      %1399 = vmatprep.subr.mxu0 0.0
      %1400 = vmatpush1.msra.mxu0 %v142
      %1401 = vmatprep.subr.mxu0 0.0
      %1402 = vmatpush1.msra.mxu0 %v141
      %1403 = vmatprep.subr.mxu0 0.0
      %1404 = vmatpush1.msra.mxu0 %v140
      %1405 = vmatprep.subr.mxu0 0.0
      %1406 = vmatpush1.msra.mxu0 %v139
      %1407 = vmatprep.subr.mxu0 0.0
      %1408 = vmatpush1.msra.mxu0 %v138
      %1409 = vmatprep.subr.mxu0 0.0
      %1410 = vmatpush1.msra.mxu0 %v137
      %1411 = vmatprep.subr.mxu0 0.0
      %1412 = vmatpush1.msra.mxu0 %v136
      %1413 = vmatprep.subr.mxu0 0.0
      %1414 = vmatpush1.msra.mxu0 %v135
      %1415 = vmatprep.subr.mxu0 0.0
      %1416 = vmatpush1.msra.mxu0 %v134
      %1417 = vmatprep.subr.mxu0 0.0
      %1418 = vmatpush1.msra.mxu0 %v133
      %1419 = vmatprep.subr.mxu0 0.0
      %1420 = vmatpush1.msra.mxu0 %v132
      %1421 = vmatprep.subr.mxu0 0.0
      %1422 = vmatpush1.msra.mxu0 %v131
      %1423 = vmatprep.subr.mxu0 0.0
      %1424 = vmatpush1.msra.mxu0 %v130
      %1425 = vmatprep.subr.mxu0 0.0
      %1426 = vmatpush1.msra.mxu0 %v129
      %1427 = vmatprep.subr.mxu0 0.0
      %1428 = vmatpush2.msra.mxu0 0.0
      %1429 = vmatprep.subr.mxu0 0.0
      %1430 = vmatpush2.msra.mxu0 0.0
      %1431 = vmatprep.subr.mxu0 0.0
      %1432 = vmatpush2.msra.mxu0 0.0
      %1433 = vmatprep.subr.mxu0 0.0
      %1434 = vmatpush2.msra.mxu0 0.0
      %1435 = vmatprep.subr.mxu0 0.0
      %1436 = vmatpush2.msra.mxu0 0.0
      %1437 = vmatprep.subr.mxu0 0.0
      %1438 = vmatpush2.msra.mxu0 0.0
      %1439 = vmatprep.subr.mxu0 0.0
      %1440 = vmatpush2.msra.mxu0 0.0
      %1441 = vmatprep.subr.mxu0 0.0
      %1442 = vmatpush2.msra.mxu0 0.0
      %1443 = vmatprep.subr.mxu0 0.0
      %1444 = vmatpush2.msra.mxu0 0.0
      %1445 = vmatprep.subr.mxu0 0.0
      %1446 = vmatpush2.msra.mxu0 0.0
      %1447 = vmatprep.subr.mxu0 0.0
      %1448 = vmatpush2.msra.mxu0 0.0
      %1449 = vmatprep.subr.mxu0 0.0
      %1450 = vmatpush2.msra.mxu0 0.0
      %1451 = vmatprep.subr.mxu0 0.0
      %1452 = vmatpush2.msra.mxu0 0.0
      %1453 = vmatprep.subr.mxu0 0.0
      %1454 = vmatpush2.msra.mxu0 0.0
      %1455 = vmatprep.subr.mxu0 0.0
      %1456 = vmatpush2.msra.mxu0 0.0
      %1457 = vmatprep.subr.mxu0 0.0
      %1458 = vmatpush2.msra.mxu0 0.0
      %1459 = vmatprep.mubr.f32.mxu0 0.0
      %1460 = vmatmul.mubr.f32.gmra.mxu0 %v1392
      %v1461 = vpop.f32.mrf.mxu0
      %v1462 = vadd.f32 %v173, %v1461
      %v1463 = vpop.f32.mrf.mxu0
      %1464 = vdwg.mxu0
      %v1465 = vmul.f32 %v356, %v1314
      %v1466 = vadd.f32 %v1465, %v1462
      %v1467 = vmul.f32 %v1466, %v359
      %vm1468 = vcmp.gt.f32.partialorder %v1467, 1.0
      %v1469 = vsel %vm1468, 1, 0
      %v1470 = vcvt.s32.f32 %v1469
      %v1471 = vmul.f32 %v364, %v1470
      %v1472 = vsub.f32 %v1466, %v1471
      %1473 = vmatprep.subr.mxu0 0.0
      %1474 = vmatpush1.msra.mxu0 %v160
      %1475 = vmatprep.subr.mxu0 0.0
      %1476 = vmatpush1.msra.mxu0 %v159
      %1477 = vmatprep.subr.mxu0 0.0
      %1478 = vmatpush1.msra.mxu0 %v158
      %1479 = vmatprep.subr.mxu0 0.0
      %1480 = vmatpush1.msra.mxu0 %v157
      %1481 = vmatprep.subr.mxu0 0.0
      %1482 = vmatpush1.msra.mxu0 %v156
      %1483 = vmatprep.subr.mxu0 0.0
      %1484 = vmatpush1.msra.mxu0 %v155
      %1485 = vmatprep.subr.mxu0 0.0
      %1486 = vmatpush1.msra.mxu0 %v154
      %1487 = vmatprep.subr.mxu0 0.0
      %1488 = vmatpush1.msra.mxu0 %v153
      %1489 = vmatprep.subr.mxu0 0.0
      %1490 = vmatpush1.msra.mxu0 %v152
      %1491 = vmatprep.subr.mxu0 0.0
      %1492 = vmatpush1.msra.mxu0 %v151
      %1493 = vmatprep.subr.mxu0 0.0
      %1494 = vmatpush1.msra.mxu0 %v150
      %1495 = vmatprep.subr.mxu0 0.0
      %1496 = vmatpush1.msra.mxu0 %v149
      %1497 = vmatprep.subr.mxu0 0.0
      %1498 = vmatpush1.msra.mxu0 %v148
      %1499 = vmatprep.subr.mxu0 0.0
      %1500 = vmatpush1.msra.mxu0 %v147
      %1501 = vmatprep.subr.mxu0 0.0
      %1502 = vmatpush1.msra.mxu0 %v146
      %1503 = vmatprep.subr.mxu0 0.0
      %1504 = vmatpush1.msra.mxu0 %v145
      %1505 = vmatprep.subr.mxu0 0.0
      %1506 = vmatpush2.msra.mxu0 0.0
      %1507 = vmatprep.subr.mxu0 0.0
      %1508 = vmatpush2.msra.mxu0 0.0
      %1509 = vmatprep.subr.mxu0 0.0
      %1510 = vmatpush2.msra.mxu0 0.0
      %1511 = vmatprep.subr.mxu0 0.0
      %1512 = vmatpush2.msra.mxu0 0.0
      %1513 = vmatprep.subr.mxu0 0.0
      %1514 = vmatpush2.msra.mxu0 0.0
      %1515 = vmatprep.subr.mxu0 0.0
      %1516 = vmatpush2.msra.mxu0 0.0
      %1517 = vmatprep.subr.mxu0 0.0
      %1518 = vmatpush2.msra.mxu0 0.0
      %1519 = vmatprep.subr.mxu0 0.0
      %1520 = vmatpush2.msra.mxu0 0.0
      %1521 = vmatprep.subr.mxu0 0.0
      %1522 = vmatpush2.msra.mxu0 0.0
      %1523 = vmatprep.subr.mxu0 0.0
      %1524 = vmatpush2.msra.mxu0 0.0
      %1525 = vmatprep.subr.mxu0 0.0
      %1526 = vmatpush2.msra.mxu0 0.0
      %1527 = vmatprep.subr.mxu0 0.0
      %1528 = vmatpush2.msra.mxu0 0.0
      %1529 = vmatprep.subr.mxu0 0.0
      %1530 = vmatpush2.msra.mxu0 0.0
      %1531 = vmatprep.subr.mxu0 0.0
      %1532 = vmatpush2.msra.mxu0 0.0
      %1533 = vmatprep.subr.mxu0 0.0
      %1534 = vmatpush2.msra.mxu0 0.0
      %1535 = vmatprep.subr.mxu0 0.0
      %1536 = vmatpush2.msra.mxu0 0.0
      %1537 = vmatprep.mubr.f32.mxu0 0.0
      %1538 = vmatmul.mubr.f32.gmra.mxu0 %v1470
      %v1539 = vpop.f32.mrf.mxu0
      %v1540 = vadd.f32 0.0, %v1539
      %v1541 = vpop.f32.mrf.mxu0
      %1542 = vdwg.mxu0
      %v1543 = vadd.f32 %v1386, %v1540
      %v1544 = vadd.f32 %v1543, %v180
      %v1545 = vmul.f32 %v275, %v1394
      %v1546 = vadd.f32 %v1545, %v272
      %v1547 = vmul.f32 %v1546, %v278
      %vm1548 = vcmp.gt.f32.partialorder %v1547, 1.0
      %v1549 = vsel %vm1548, 1, 0
      %v1550 = vcvt.s32.f32 %v1549
      %v1551 = vmul.f32 %v283, %v1550
      %v1552 = vsub.f32 %v1546, %v1551
      %1553 = vmatprep.subr.mxu0 0.0
      %1554 = vmatpush1.msra.mxu0 %v144
      %1555 = vmatprep.subr.mxu0 0.0
      %1556 = vmatpush1.msra.mxu0 %v143
      %1557 = vmatprep.subr.mxu0 0.0
      %1558 = vmatpush1.msra.mxu0 %v142
      %1559 = vmatprep.subr.mxu0 0.0
      %1560 = vmatpush1.msra.mxu0 %v141
      %1561 = vmatprep.subr.mxu0 0.0
      %1562 = vmatpush1.msra.mxu0 %v140
      %1563 = vmatprep.subr.mxu0 0.0
      %1564 = vmatpush1.msra.mxu0 %v139
      %1565 = vmatprep.subr.mxu0 0.0
      %1566 = vmatpush1.msra.mxu0 %v138
      %1567 = vmatprep.subr.mxu0 0.0
      %1568 = vmatpush1.msra.mxu0 %v137
      %1569 = vmatprep.subr.mxu0 0.0
      %1570 = vmatpush1.msra.mxu0 %v136
      %1571 = vmatprep.subr.mxu0 0.0
      %1572 = vmatpush1.msra.mxu0 %v135
      %1573 = vmatprep.subr.mxu0 0.0
      %1574 = vmatpush1.msra.mxu0 %v134
      %1575 = vmatprep.subr.mxu0 0.0
      %1576 = vmatpush1.msra.mxu0 %v133
      %1577 = vmatprep.subr.mxu0 0.0
      %1578 = vmatpush1.msra.mxu0 %v132
      %1579 = vmatprep.subr.mxu0 0.0
      %1580 = vmatpush1.msra.mxu0 %v131
      %1581 = vmatprep.subr.mxu0 0.0
      %1582 = vmatpush1.msra.mxu0 %v130
      %1583 = vmatprep.subr.mxu0 0.0
      %1584 = vmatpush1.msra.mxu0 %v129
      %1585 = vmatprep.subr.mxu0 0.0
      %1586 = vmatpush2.msra.mxu0 0.0
      %1587 = vmatprep.subr.mxu0 0.0
      %1588 = vmatpush2.msra.mxu0 0.0
      %1589 = vmatprep.subr.mxu0 0.0
      %1590 = vmatpush2.msra.mxu0 0.0
      %1591 = vmatprep.subr.mxu0 0.0
      %1592 = vmatpush2.msra.mxu0 0.0
      %1593 = vmatprep.subr.mxu0 0.0
      %1594 = vmatpush2.msra.mxu0 0.0
      %1595 = vmatprep.subr.mxu0 0.0
      %1596 = vmatpush2.msra.mxu0 0.0
      %1597 = vmatprep.subr.mxu0 0.0
      %1598 = vmatpush2.msra.mxu0 0.0
      %1599 = vmatprep.subr.mxu0 0.0
      %1600 = vmatpush2.msra.mxu0 0.0
      %1601 = vmatprep.subr.mxu0 0.0
      %1602 = vmatpush2.msra.mxu0 0.0
      %1603 = vmatprep.subr.mxu0 0.0
      %1604 = vmatpush2.msra.mxu0 0.0
      %1605 = vmatprep.subr.mxu0 0.0
      %1606 = vmatpush2.msra.mxu0 0.0
      %1607 = vmatprep.subr.mxu0 0.0
      %1608 = vmatpush2.msra.mxu0 0.0
      %1609 = vmatprep.subr.mxu0 0.0
      %1610 = vmatpush2.msra.mxu0 0.0
      %1611 = vmatprep.subr.mxu0 0.0
      %1612 = vmatpush2.msra.mxu0 0.0
      %1613 = vmatprep.subr.mxu0 0.0
      %1614 = vmatpush2.msra.mxu0 0.0
      %1615 = vmatprep.subr.mxu0 0.0
      %1616 = vmatpush2.msra.mxu0 0.0
      %1617 = vmatprep.mubr.f32.mxu0 0.0
      %1618 = vmatmul.mubr.f32.gmra.mxu0 %v1550
      %v1619 = vpop.f32.mrf.mxu0
      %v1620 = vadd.f32 %v173, %v1619
      %v1621 = vpop.f32.mrf.mxu0
      %1622 = vdwg.mxu0
      %v1623 = vmul.f32 %v356, %v1472
      %v1624 = vadd.f32 %v1623, %v1620
      %v1625 = vmul.f32 %v1624, %v359
      %vm1626 = vcmp.gt.f32.partialorder %v1625, 1.0
      %v1627 = vsel %vm1626, 1, 0
      %v1628 = vcvt.s32.f32 %v1627
      %v1629 = vmul.f32 %v364, %v1628
      %v1630 = vsub.f32 %v1624, %v1629
      %1631 = vmatprep.subr.mxu0 0.0
      %1632 = vmatpush1.msra.mxu0 %v160
      %1633 = vmatprep.subr.mxu0 0.0
      %1634 = vmatpush1.msra.mxu0 %v159
      %1635 = vmatprep.subr.mxu0 0.0
      %1636 = vmatpush1.msra.mxu0 %v158
      %1637 = vmatprep.subr.mxu0 0.0
      %1638 = vmatpush1.msra.mxu0 %v157
      %1639 = vmatprep.subr.mxu0 0.0
      %1640 = vmatpush1.msra.mxu0 %v156
      %1641 = vmatprep.subr.mxu0 0.0
      %1642 = vmatpush1.msra.mxu0 %v155
      %1643 = vmatprep.subr.mxu0 0.0
      %1644 = vmatpush1.msra.mxu0 %v154
      %1645 = vmatprep.subr.mxu0 0.0
      %1646 = vmatpush1.msra.mxu0 %v153
      %1647 = vmatprep.subr.mxu0 0.0
      %1648 = vmatpush1.msra.mxu0 %v152
      %1649 = vmatprep.subr.mxu0 0.0
      %1650 = vmatpush1.msra.mxu0 %v151
      %1651 = vmatprep.subr.mxu0 0.0
      %1652 = vmatpush1.msra.mxu0 %v150
      %1653 = vmatprep.subr.mxu0 0.0
      %1654 = vmatpush1.msra.mxu0 %v149
      %1655 = vmatprep.subr.mxu0 0.0
      %1656 = vmatpush1.msra.mxu0 %v148
      %1657 = vmatprep.subr.mxu0 0.0
      %1658 = vmatpush1.msra.mxu0 %v147
      %1659 = vmatprep.subr.mxu0 0.0
      %1660 = vmatpush1.msra.mxu0 %v146
      %1661 = vmatprep.subr.mxu0 0.0
      %1662 = vmatpush1.msra.mxu0 %v145
      %1663 = vmatprep.subr.mxu0 0.0
      %1664 = vmatpush2.msra.mxu0 0.0
      %1665 = vmatprep.subr.mxu0 0.0
      %1666 = vmatpush2.msra.mxu0 0.0
      %1667 = vmatprep.subr.mxu0 0.0
      %1668 = vmatpush2.msra.mxu0 0.0
      %1669 = vmatprep.subr.mxu0 0.0
      %1670 = vmatpush2.msra.mxu0 0.0
      %1671 = vmatprep.subr.mxu0 0.0
      %1672 = vmatpush2.msra.mxu0 0.0
      %1673 = vmatprep.subr.mxu0 0.0
      %1674 = vmatpush2.msra.mxu0 0.0
      %1675 = vmatprep.subr.mxu0 0.0
      %1676 = vmatpush2.msra.mxu0 0.0
      %1677 = vmatprep.subr.mxu0 0.0
      %1678 = vmatpush2.msra.mxu0 0.0
      %1679 = vmatprep.subr.mxu0 0.0
      %1680 = vmatpush2.msra.mxu0 0.0
      %1681 = vmatprep.subr.mxu0 0.0
      %1682 = vmatpush2.msra.mxu0 0.0
      %1683 = vmatprep.subr.mxu0 0.0
      %1684 = vmatpush2.msra.mxu0 0.0
      %1685 = vmatprep.subr.mxu0 0.0
      %1686 = vmatpush2.msra.mxu0 0.0
      %1687 = vmatprep.subr.mxu0 0.0
      %1688 = vmatpush2.msra.mxu0 0.0
      %1689 = vmatprep.subr.mxu0 0.0
      %1690 = vmatpush2.msra.mxu0 0.0
      %1691 = vmatprep.subr.mxu0 0.0
      %1692 = vmatpush2.msra.mxu0 0.0
      %1693 = vmatprep.subr.mxu0 0.0
      %1694 = vmatpush2.msra.mxu0 0.0
      %1695 = vmatprep.mubr.f32.mxu0 0.0
      %1696 = vmatmul.mubr.f32.gmra.mxu0 %v1628
      %v1697 = vpop.f32.mrf.mxu0
      %v1698 = vadd.f32 0.0, %v1697
      %v1699 = vpop.f32.mrf.mxu0
      %1700 = vdwg.mxu0
      %v1701 = vadd.f32 %v1544, %v1698
      %v1702 = vadd.f32 %v1701, %v180
      %v1703 = vmul.f32 %v275, %v1552
      %v1704 = vadd.f32 %v1703, %v272
      %v1705 = vmul.f32 %v1704, %v278
      %vm1706 = vcmp.gt.f32.partialorder %v1705, 1.0
      %v1707 = vsel %vm1706, 1, 0
      %v1708 = vcvt.s32.f32 %v1707
      %v1709 = vmul.f32 %v283, %v1708
      %v1710 = vsub.f32 %v1704, %v1709
      %1711 = vmatprep.subr.mxu0 0.0
      %1712 = vmatpush1.msra.mxu0 %v144
      %1713 = vmatprep.subr.mxu0 0.0
      %1714 = vmatpush1.msra.mxu0 %v143
      %1715 = vmatprep.subr.mxu0 0.0
      %1716 = vmatpush1.msra.mxu0 %v142
      %1717 = vmatprep.subr.mxu0 0.0
      %1718 = vmatpush1.msra.mxu0 %v141
      %1719 = vmatprep.subr.mxu0 0.0
      %1720 = vmatpush1.msra.mxu0 %v140
      %1721 = vmatprep.subr.mxu0 0.0
      %1722 = vmatpush1.msra.mxu0 %v139
      %1723 = vmatprep.subr.mxu0 0.0
      %1724 = vmatpush1.msra.mxu0 %v138
      %1725 = vmatprep.subr.mxu0 0.0
      %1726 = vmatpush1.msra.mxu0 %v137
      %1727 = vmatprep.subr.mxu0 0.0
      %1728 = vmatpush1.msra.mxu0 %v136
      %1729 = vmatprep.subr.mxu0 0.0
      %1730 = vmatpush1.msra.mxu0 %v135
      %1731 = vmatprep.subr.mxu0 0.0
      %1732 = vmatpush1.msra.mxu0 %v134
      %1733 = vmatprep.subr.mxu0 0.0
      %1734 = vmatpush1.msra.mxu0 %v133
      %1735 = vmatprep.subr.mxu0 0.0
      %1736 = vmatpush1.msra.mxu0 %v132
      %1737 = vmatprep.subr.mxu0 0.0
      %1738 = vmatpush1.msra.mxu0 %v131
      %1739 = vmatprep.subr.mxu0 0.0
      %1740 = vmatpush1.msra.mxu0 %v130
      %1741 = vmatprep.subr.mxu0 0.0
      %1742 = vmatpush1.msra.mxu0 %v129
      %1743 = vmatprep.subr.mxu0 0.0
      %1744 = vmatpush2.msra.mxu0 0.0
      %1745 = vmatprep.subr.mxu0 0.0
      %1746 = vmatpush2.msra.mxu0 0.0
      %1747 = vmatprep.subr.mxu0 0.0
      %1748 = vmatpush2.msra.mxu0 0.0
      %1749 = vmatprep.subr.mxu0 0.0
      %1750 = vmatpush2.msra.mxu0 0.0
      %1751 = vmatprep.subr.mxu0 0.0
      %1752 = vmatpush2.msra.mxu0 0.0
      %1753 = vmatprep.subr.mxu0 0.0
      %1754 = vmatpush2.msra.mxu0 0.0
      %1755 = vmatprep.subr.mxu0 0.0
      %1756 = vmatpush2.msra.mxu0 0.0
      %1757 = vmatprep.subr.mxu0 0.0
      %1758 = vmatpush2.msra.mxu0 0.0
      %1759 = vmatprep.subr.mxu0 0.0
      %1760 = vmatpush2.msra.mxu0 0.0
      %1761 = vmatprep.subr.mxu0 0.0
      %1762 = vmatpush2.msra.mxu0 0.0
      %1763 = vmatprep.subr.mxu0 0.0
      %1764 = vmatpush2.msra.mxu0 0.0
      %1765 = vmatprep.subr.mxu0 0.0
      %1766 = vmatpush2.msra.mxu0 0.0
      %1767 = vmatprep.subr.mxu0 0.0
      %1768 = vmatpush2.msra.mxu0 0.0
      %1769 = vmatprep.subr.mxu0 0.0
      %1770 = vmatpush2.msra.mxu0 0.0
      %1771 = vmatprep.subr.mxu0 0.0
      %1772 = vmatpush2.msra.mxu0 0.0
      %1773 = vmatprep.subr.mxu0 0.0
      %1774 = vmatpush2.msra.mxu0 0.0
      %1775 = vmatprep.mubr.f32.mxu0 0.0
      %1776 = vmatmul.mubr.f32.gmra.mxu0 %v1708
      %v1777 = vpop.f32.mrf.mxu0
      %v1778 = vadd.f32 %v173, %v1777
      %v1779 = vpop.f32.mrf.mxu0
      %1780 = vdwg.mxu0
      %v1781 = vmul.f32 %v356, %v1630
      %v1782 = vadd.f32 %v1781, %v1778
      %v1783 = vmul.f32 %v1782, %v359
      %vm1784 = vcmp.gt.f32.partialorder %v1783, 1.0
      %v1785 = vsel %vm1784, 1, 0
      %v1786 = vcvt.s32.f32 %v1785
      %v1787 = vmul.f32 %v364, %v1786
      %v1788 = vsub.f32 %v1782, %v1787
      %1789 = vmatprep.subr.mxu0 0.0
      %1790 = vmatpush1.msra.mxu0 %v160
      %1791 = vmatprep.subr.mxu0 0.0
      %1792 = vmatpush1.msra.mxu0 %v159
      %1793 = vmatprep.subr.mxu0 0.0
      %1794 = vmatpush1.msra.mxu0 %v158
      %1795 = vmatprep.subr.mxu0 0.0
      %1796 = vmatpush1.msra.mxu0 %v157
      %1797 = vmatprep.subr.mxu0 0.0
      %1798 = vmatpush1.msra.mxu0 %v156
      %1799 = vmatprep.subr.mxu0 0.0
      %1800 = vmatpush1.msra.mxu0 %v155
      %1801 = vmatprep.subr.mxu0 0.0
      %1802 = vmatpush1.msra.mxu0 %v154
      %1803 = vmatprep.subr.mxu0 0.0
      %1804 = vmatpush1.msra.mxu0 %v153
      %1805 = vmatprep.subr.mxu0 0.0
      %1806 = vmatpush1.msra.mxu0 %v152
      %1807 = vmatprep.subr.mxu0 0.0
      %1808 = vmatpush1.msra.mxu0 %v151
      %1809 = vmatprep.subr.mxu0 0.0
      %1810 = vmatpush1.msra.mxu0 %v150
      %1811 = vmatprep.subr.mxu0 0.0
      %1812 = vmatpush1.msra.mxu0 %v149
      %1813 = vmatprep.subr.mxu0 0.0
      %1814 = vmatpush1.msra.mxu0 %v148
      %1815 = vmatprep.subr.mxu0 0.0
      %1816 = vmatpush1.msra.mxu0 %v147
      %1817 = vmatprep.subr.mxu0 0.0
      %1818 = vmatpush1.msra.mxu0 %v146
      %1819 = vmatprep.subr.mxu0 0.0
      %1820 = vmatpush1.msra.mxu0 %v145
      %1821 = vmatprep.subr.mxu0 0.0
      %1822 = vmatpush2.msra.mxu0 0.0
      %1823 = vmatprep.subr.mxu0 0.0
      %1824 = vmatpush2.msra.mxu0 0.0
      %1825 = vmatprep.subr.mxu0 0.0
      %1826 = vmatpush2.msra.mxu0 0.0
      %1827 = vmatprep.subr.mxu0 0.0
      %1828 = vmatpush2.msra.mxu0 0.0
      %1829 = vmatprep.subr.mxu0 0.0
      %1830 = vmatpush2.msra.mxu0 0.0
      %1831 = vmatprep.subr.mxu0 0.0
      %1832 = vmatpush2.msra.mxu0 0.0
      %1833 = vmatprep.subr.mxu0 0.0
      %1834 = vmatpush2.msra.mxu0 0.0
      %1835 = vmatprep.subr.mxu0 0.0
      %1836 = vmatpush2.msra.mxu0 0.0
      %1837 = vmatprep.subr.mxu0 0.0
      %1838 = vmatpush2.msra.mxu0 0.0
      %1839 = vmatprep.subr.mxu0 0.0
      %1840 = vmatpush2.msra.mxu0 0.0
      %1841 = vmatprep.subr.mxu0 0.0
      %1842 = vmatpush2.msra.mxu0 0.0
      %1843 = vmatprep.subr.mxu0 0.0
      %1844 = vmatpush2.msra.mxu0 0.0
      %1845 = vmatprep.subr.mxu0 0.0
      %1846 = vmatpush2.msra.mxu0 0.0
      %1847 = vmatprep.subr.mxu0 0.0
      %1848 = vmatpush2.msra.mxu0 0.0
      %1849 = vmatprep.subr.mxu0 0.0
      %1850 = vmatpush2.msra.mxu0 0.0
      %1851 = vmatprep.subr.mxu0 0.0
      %1852 = vmatpush2.msra.mxu0 0.0
      %1853 = vmatprep.mubr.f32.mxu0 0.0
      %1854 = vmatmul.mubr.f32.gmra.mxu0 %v1786
      %v1855 = vpop.f32.mrf.mxu0
      %v1856 = vadd.f32 0.0, %v1855
      %v1857 = vpop.f32.mrf.mxu0
      %1858 = vdwg.mxu0
      %v1859 = vadd.f32 %v1702, %v1856
      %v1860 = vadd.f32 %v1859, %v180
      %s1861 = smul.u32 0, 8
      %s1862 = sadd.s32 %s1861, %s186
      %p1863 = scmp.lt.s32.totalorder %s1862, %s115
      %s1864 = scalar_select %p1863, 1, 0
      %v1865 = vstv %s1864
      %vm1866 = vcmp.eq.s32.totalorder %v1865, 1
      %v1867 = vsel %vm1866, %v1710, %v191
      %v1868 = vsel %vm1866, %v1788, %v192
      %v1869 = vsel %vm1866, %v1860, %v193
    $region66: #{tpu_custom_call.1} parent=1 // loop_footer
      %s190 = sadd.s32 1, %s186
    $region67: #{tpu_custom_call.1} parent=1 // loop_footer_branch
      %185 = sbr.rel target = $region63
    $region68: #{tpu_custom_call.1} parent=1 // loop_exit
      _
    %1870 = vst [vmem:[#allocation2] sm:$0xff] %v191
    %1871 = vst [vmem:[#allocation3] sm:$0xff] %v192
    %1872 = vst [vmem:[#allocation15] sm:$0xff] %v193
    // Predicated region
    $region69: #{tpu_custom_call.1} parent=1 // pred_check
      _
    $region70: #{tpu_custom_call.1} parent=1 // pred_check_branch
      %1874 = sbr.rel (0) target = $region72
    $region71: #{tpu_custom_call.1} parent=1 // pred_region
      %s1876 = ssub.s32 128, 128
      %1877 = vsyncadd [#allocation7], %s1876
      %s1879 = sshll.u32 [#allocation15], 4
      %s1880 = int_to_ptr.vmem [resolvable:$true] %s1879
      %1882 = dma.vmem_to_hbm [thread:$0]  %s1880, 128, %s9, [#allocation7]
    $region72: #{tpu_custom_call.1} parent=1 // pred_fallthru
      _
    // Predicated region
    $region73: #{tpu_custom_call.1} parent=1 // pred_check
      _
    $region74: #{tpu_custom_call.1} parent=1 // pred_check_branch
      %1884 = sbr.rel (0) target = $region76
    $region75: #{tpu_custom_call.1} parent=1 // pred_region
      %1885 = dma.done [#allocation7], 128
    $region76: #{tpu_custom_call.1} parent=1 // pred_fallthru
      _
    %1886 = vsyncpa [#allocation6], 1
    %1887 = vsyncpa [#allocation11], 1
    %1888 = vsyncpa [#allocation14], 1
    %1889 = vsyncpa [#allocation7], 1
    %1890 = vsyncpa [#allocation8], 1

</llo_original>
